<compile_context>
chip_gen: v7x
topology: tpu7x:2x2x1
jax: 0.10.0
libtpu: 0.0.40
codegen_flags: <defaults>
</compile_context>

<pallas_src>
import functools

import jax
import jax.numpy as jnp
from jax import lax
from jax.experimental import pallas as pl
from jax.experimental.pallas import tpu as pltpu


def _resblock_conv3x3_kernel(xt_ref, w_ref, b_ref, out_ref, *, TH, W):
    """Fused out = x + conv3x3(x) + b for one (batch, row-block) tile.

    xt_ref : (C, (TH+2)*W + 2) f32 VMEM.  Per-input-channel row-flattened tile:
             rows = [top halo row, TH output rows, bottom halo row] of the
             H-padded image, flattened over (row, col), plus one zero element of
             padding on each end of the flat axis (so every tap is a static
             in-range lane-window slice).
    w_ref  : (3*3*C*C,) f32 SMEM.  HWIO weights flattened as [ky, kx, ci, co].
    b_ref  : (1, C)     f32 SMEM.  Bias.
    out_ref: (C, TH*W)  lane-dense output tile (row-flattened channel planes).
    """
    C = xt_ref.shape[0]
    TW = TH * W

    # Load the whole (small) tile once; every tap below is a static slice of it
    # (sublane select + lane shift), i.e. no reshapes and no materialized copies.
    x = xt_ref[...].astype(jnp.float32)

    # Column masks: taps that look one pixel left/right must not read across a
    # row boundary of the flattened layout (emulates zero-padding in W).
    col = lax.broadcasted_iota(jnp.int32, (1, TW), 1) % W
    mask_l = (col > 0).astype(jnp.float32)        # dx = -1 valid iff x > 0
    mask_r = (col < (W - 1)).astype(jnp.float32)  # dx = +1 valid iff x < W-1

    # Accumulators start from residual + bias (out = x + conv(x) + b).
    # Center tap offset (ky=1, kx=1) in the flat/padded coordinates:
    c0 = W + 1
    accs = [x[co:co + 1, c0:c0 + TW] + b_ref[0, co] for co in range(C)]

    # 3x3 conv: 9 taps per input channel, each a shifted lane-window view,
    # mixed into the C output channels with scalar weights from SMEM.
    # Pure VPU FMAs — no MXU (a (TM,4)x(4,4) matmul would be ~0.02% MXU util).
    for ci in range(C):
        for ky in range(3):
            for kx in range(3):
                s = ky * W + (kx - 1) + 1          # static lane offset of this tap
                tap = x[ci:ci + 1, s:s + TW]
                if kx == 0:
                    tap = tap * mask_l
                elif kx == 2:
                    tap = tap * mask_r
                base = ((ky * 3 + kx) * C + ci) * C
                for co in range(C):
                    accs[co] = accs[co] + w_ref[base + co] * tap

    # Single lane-dense store of the whole (C, TH*W) block.
    out_ref[...] = jnp.concatenate(accs, axis=0).astype(out_ref.dtype)


def _pick_row_tile(H, W, C, dtype_bytes=4, lane=128,
                   vmem_budget=8 * 1024 * 1024):
    """Pick a row-tile TH: divides H, makes TH*W a multiple of 128 lanes
    (unmasked stores), and keeps the double-buffered tile well under VMEM
    (budget chosen far below v7x's 64 MiB / the 32 MiB default scoped limit)."""
    def tile_bytes(th):
        lf = (th + 2) * W + 2
        return 2 * dtype_bytes * C * (lf + th * W)   # 2x for double buffering
    for th in range(1, H + 1):
        if H % th == 0 and (th * W) % lane == 0 and tile_bytes(th) <= vmem_budget:
            return th
    for th in range(H, 0, -1):                       # fallback: masked stores OK
        if H % th == 0 and tile_bytes(th) <= vmem_budget:
            return th
    return 1


def resblock_forward(x_nchw, w_hwio, bias):
    """ResBlock forward: x + Conv2d_3x3(x) (padding=1, bias=True), NCHW in/out."""
    N, C, H, W = x_nchw.shape
    TH = _pick_row_tile(H, W, C)
    HB = H // TH
    TW = TH * W
    Lf = (TH + 2) * W + 2

    # ---- layout prep (stays in NCHW; no NHWC round trip) -------------------
    # Pad H by 1 (conv halo), build overlapping (TH+2)-row blocks per batch,
    # flatten (rows, W) per channel and add a 1-element flat halo on each side.
    # This is one fused XLA gather/pad pass over a small tensor; with a fully
    # NHWC-native model one would instead express the halo with pl.Element /
    # manual DMA windows and skip it.
    xp = jnp.pad(x_nchw, ((0, 0), (0, 0), (1, 1), (0, 0)))          # (N,C,H+2,W)
    blocks = [xp[:, :, hb * TH: hb * TH + TH + 2, :] for hb in range(HB)]
    xb = jnp.stack(blocks, axis=1)                                   # (N,HB,C,TH+2,W)
    xb = xb.reshape(N, HB, C, (TH + 2) * W)
    xb = jnp.pad(xb, ((0, 0), (0, 0), (0, 0), (1, 1)))               # (N,HB,C,Lf)

    w_flat = w_hwio.astype(jnp.float32).reshape(-1)                  # [ky,kx,ci,co]
    b2d = bias.astype(jnp.float32).reshape(1, C)

    kernel = functools.partial(_resblock_conv3x3_kernel, TH=TH, W=W)

    out_blocks = pl.pallas_call(
        kernel,
        out_shape=jax.ShapeDtypeStruct((N, HB, C, TW), x_nchw.dtype),
        grid=(N, HB),
        in_specs=[
            # per-grid-step halo'd row tile (leading dims squeezed)
            pl.BlockSpec((None, None, C, Lf), lambda n, hb: (n, hb, 0, 0)),
            # conv weights and bias live in SMEM as scalar tables
            pl.BlockSpec(memory_space=pltpu.MemorySpace.SMEM),
            pl.BlockSpec(memory_space=pltpu.MemorySpace.SMEM),
        ],
        out_specs=pl.BlockSpec((None, None, C, TW), lambda n, hb: (n, hb, 0, 0)),
        compiler_params=pltpu.CompilerParams(
            dimension_semantics=("parallel", "parallel"),   # megacore on v7x
            vmem_limit_bytes=32 * 1024 * 1024),
    )(xb, w_flat, b2d)

    # Undo the row-flattened block layout (pure wrapper reshape/transpose glue).
    out = (out_blocks.reshape(N, HB, C, TH, W)
           .transpose(0, 2, 1, 3, 4)
           .reshape(N, C, H, W))
    return out


def reference_forward(x_nchw, w_hwio, bias):
    """Plain-JAX reference for correctness checking (NCHW throughout)."""
    conv = lax.conv_general_dilated(
        x_nchw, w_hwio, window_strides=(1, 1), padding="SAME",
        dimension_numbers=("NCHW", "HWIO", "NCHW"))
    return x_nchw + conv + bias[None, :, None, None]


if __name__ == "__main__":
    key = jax.random.PRNGKey(0)
    kx_, kw_, kb_ = jax.random.split(key, 3)

    N, C, H, W = 2, 4, 16, 16
    x = jax.random.normal(kx_, (N, C, H, W), dtype=jnp.float32)

    # Deterministic parameters for Conv2d(C, C, kernel_size=3, padding=1), HWIO.
    w = 0.1 * jax.random.normal(kw_, (3, 3, C, C), dtype=jnp.float32)
    b = 0.05 * jax.random.normal(kb_, (C,), dtype=jnp.float32)

    out = jax.block_until_ready(resblock_forward(x, w, b))
    ref = reference_forward(x, w, b)

    assert out.shape == (N, C, H, W)
    assert jnp.allclose(out, ref, atol=1e-4, rtol=1e-4), "mismatch vs reference"

    print("KERNEL_OK")
</pallas_src>

<mosaic_0001>
module attributes {stable_mosaic.version = 11 : i64} {
  func.func @_resblock_conv3x3_kernel(%arg0: i32, %arg1: i32, %arg2: memref<1x1x4x162xf32, #tpu.memory_space<vmem>>, %arg3: memref<144xf32, #tpu.memory_space<smem>>, %arg4: memref<1x4xf32, #tpu.memory_space<smem>>, %arg5: memref<1x1x4x128xf32, #tpu.memory_space<vmem>>) attributes {dimension_semantics = [#tpu.dimension_semantics<parallel>, #tpu.dimension_semantics<parallel>], iteration_bounds = array<i64: 2, 2>, scalar_prefetch = 0 : i64, scratch_operands = 0 : i64, tpu.core_type = #tpu.core_type<tc>, window_params = [{transform_indices = @transform_0, window_bounds = array<i64: 1, 1, 4, 162>}, {transform_indices = @transform_1, window_bounds = array<i64: 144>}, {transform_indices = @transform_2, window_bounds = array<i64: 1, 4>}, {transform_indices = @transform_3, window_bounds = array<i64: 1, 1, 4, 128>}]} {
    %c0 = arith.constant 0 : index
    %c0_0 = arith.constant 0 : index
    %c0_1 = arith.constant 0 : index
    %c0_2 = arith.constant 0 : index
    %0 = vector.load %arg2[%c0, %c0_0, %c0_1, %c0_2] : memref<1x1x4x162xf32, #tpu.memory_space<vmem>>, vector<1x1x4x162xf32>
    %1 = vector.shape_cast %0 : vector<1x1x4x162xf32> to vector<4x162xf32>
    %2 = tpu.iota {dimensions = array<i32: 1>} : vector<1x128xi32>
    %c16_i32 = arith.constant 16 : i32
    %c0_i32 = arith.constant 0 : i32
    %3 = arith.cmpi eq, %c16_i32, %c0_i32 : i32
    %c1_i32 = arith.constant 1 : i32
    %4 = arith.select %3, %c1_i32, %c16_i32 : i32
    %5 = vector.broadcast %4 : i32 to vector<1x128xi32>
    %6 = arith.remsi %2, %5 : vector<1x128xi32>
    %c0_i32_3 = arith.constant 0 : i32
    %7 = vector.broadcast %c0_i32_3 : i32 to vector<1x128xi32>
    %8 = arith.cmpi ne, %6, %7 : vector<1x128xi32>
    %c0_i32_4 = arith.constant 0 : i32
    %9 = vector.broadcast %c0_i32_4 : i32 to vector<1x128xi32>
    %10 = arith.cmpi slt, %6, %9 : vector<1x128xi32>
    %c0_i32_5 = arith.constant 0 : i32
    %11 = arith.cmpi slt, %4, %c0_i32_5 : i32
    %12 = vector.broadcast %11 : i1 to vector<1x128xi1>
    %13 = vector.broadcast %12 : vector<1x128xi1> to vector<1x128xi1>
    %14 = arith.xori %10, %13 : vector<1x128xi1>
    %15 = arith.andi %14, %8 : vector<1x128xi1>
    %16 = vector.broadcast %4 : i32 to vector<1x128xi32>
    %17 = arith.addi %6, %16 : vector<1x128xi32>
    %18 = arith.select %15, %17, %6 : vector<1x128xi1>, vector<1x128xi32>
    %c0_i32_6 = arith.constant 0 : i32
    %19 = vector.broadcast %c0_i32_6 : i32 to vector<1x128xi32>
    %20 = arith.cmpi sgt, %18, %19 : vector<1x128xi32>
    %21 = arith.extui %20 : vector<1x128xi1> to vector<1x128xi32>
    %22 = arith.sitofp %21 : vector<1x128xi32> to vector<1x128xf32>
    %c15_i32 = arith.constant 15 : i32
    %23 = vector.broadcast %c15_i32 : i32 to vector<1x128xi32>
    %24 = arith.cmpi slt, %18, %23 : vector<1x128xi32>
    %25 = arith.extui %24 : vector<1x128xi1> to vector<1x128xi32>
    %26 = arith.sitofp %25 : vector<1x128xi32> to vector<1x128xf32>
    %27 = vector.extract_strided_slice %1 {offsets = [0, 17], sizes = [1, 128], strides = [1, 1]} : vector<4x162xf32> to vector<1x128xf32>
    %c0_7 = arith.constant 0 : index
    %c0_8 = arith.constant 0 : index
    %28 = memref.load %arg4[%c0_7, %c0_8] : memref<1x4xf32, #tpu.memory_space<smem>>
    %29 = vector.broadcast %28 : f32 to vector<1x128xf32>
    %30 = arith.addf %27, %29 : vector<1x128xf32>
    %31 = vector.extract_strided_slice %1 {offsets = [1, 17], sizes = [1, 128], strides = [1, 1]} : vector<4x162xf32> to vector<1x128xf32>
    %c0_9 = arith.constant 0 : index
    %c1 = arith.constant 1 : index
    %32 = memref.load %arg4[%c0_9, %c1] : memref<1x4xf32, #tpu.memory_space<smem>>
    %33 = vector.broadcast %32 : f32 to vector<1x128xf32>
    %34 = arith.addf %31, %33 : vector<1x128xf32>
    %35 = vector.extract_strided_slice %1 {offsets = [2, 17], sizes = [1, 128], strides = [1, 1]} : vector<4x162xf32> to vector<1x128xf32>
    %c0_10 = arith.constant 0 : index
    %c2 = arith.constant 2 : index
    %36 = memref.load %arg4[%c0_10, %c2] : memref<1x4xf32, #tpu.memory_space<smem>>
    %37 = vector.broadcast %36 : f32 to vector<1x128xf32>
    %38 = arith.addf %35, %37 : vector<1x128xf32>
    %39 = vector.extract_strided_slice %1 {offsets = [3, 17], sizes = [1, 128], strides = [1, 1]} : vector<4x162xf32> to vector<1x128xf32>
    %c0_11 = arith.constant 0 : index
    %c3 = arith.constant 3 : index
    %40 = memref.load %arg4[%c0_11, %c3] : memref<1x4xf32, #tpu.memory_space<smem>>
    %41 = vector.broadcast %40 : f32 to vector<1x128xf32>
    %42 = arith.addf %39, %41 : vector<1x128xf32>
    %43 = vector.extract_strided_slice %1 {offsets = [0, 0], sizes = [1, 128], strides = [1, 1]} : vector<4x162xf32> to vector<1x128xf32>
    %44 = arith.mulf %43, %22 : vector<1x128xf32>
    %c0_12 = arith.constant 0 : index
    %45 = memref.load %arg3[%c0_12] : memref<144xf32, #tpu.memory_space<smem>>
    %46 = vector.broadcast %45 : f32 to vector<1x128xf32>
    %47 = arith.mulf %46, %44 : vector<1x128xf32>
    %48 = arith.addf %30, %47 : vector<1x128xf32>
    %c1_13 = arith.constant 1 : index
    %49 = memref.load %arg3[%c1_13] : memref<144xf32, #tpu.memory_space<smem>>
    %50 = vector.broadcast %49 : f32 to vector<1x128xf32>
    %51 = arith.mulf %50, %44 : vector<1x128xf32>
    %52 = arith.addf %34, %51 : vector<1x128xf32>
    %c2_14 = arith.constant 2 : index
    %53 = memref.load %arg3[%c2_14] : memref<144xf32, #tpu.memory_space<smem>>
    %54 = vector.broadcast %53 : f32 to vector<1x128xf32>
    %55 = arith.mulf %54, %44 : vector<1x128xf32>
    %56 = arith.addf %38, %55 : vector<1x128xf32>
    %c3_15 = arith.constant 3 : index
    %57 = memref.load %arg3[%c3_15] : memref<144xf32, #tpu.memory_space<smem>>
    %58 = vector.broadcast %57 : f32 to vector<1x128xf32>
    %59 = arith.mulf %58, %44 : vector<1x128xf32>
    %60 = arith.addf %42, %59 : vector<1x128xf32>
    %61 = vector.extract_strided_slice %1 {offsets = [0, 1], sizes = [1, 128], strides = [1, 1]} : vector<4x162xf32> to vector<1x128xf32>
    %c16 = arith.constant 16 : index
    %62 = memref.load %arg3[%c16] : memref<144xf32, #tpu.memory_space<smem>>
    %63 = vector.broadcast %62 : f32 to vector<1x128xf32>
    %64 = arith.mulf %63, %61 : vector<1x128xf32>
    %65 = arith.addf %48, %64 : vector<1x128xf32>
    %c17 = arith.constant 17 : index
    %66 = memref.load %arg3[%c17] : memref<144xf32, #tpu.memory_space<smem>>
    %67 = vector.broadcast %66 : f32 to vector<1x128xf32>
    %68 = arith.mulf %67, %61 : vector<1x128xf32>
    %69 = arith.addf %52, %68 : vector<1x128xf32>
    %c18 = arith.constant 18 : index
    %70 = memref.load %arg3[%c18] : memref<144xf32, #tpu.memory_space<smem>>
    %71 = vector.broadcast %70 : f32 to vector<1x128xf32>
    %72 = arith.mulf %71, %61 : vector<1x128xf32>
    %73 = arith.addf %56, %72 : vector<1x128xf32>
    %c19 = arith.constant 19 : index
    %74 = memref.load %arg3[%c19] : memref<144xf32, #tpu.memory_space<smem>>
    %75 = vector.broadcast %74 : f32 to vector<1x128xf32>
    %76 = arith.mulf %75, %61 : vector<1x128xf32>
    %77 = arith.addf %60, %76 : vector<1x128xf32>
    %78 = vector.extract_strided_slice %1 {offsets = [0, 2], sizes = [1, 128], strides = [1, 1]} : vector<4x162xf32> to vector<1x128xf32>
    %79 = arith.mulf %78, %26 : vector<1x128xf32>
    %c32 = arith.constant 32 : index
    %80 = memref.load %arg3[%c32] : memref<144xf32, #tpu.memory_space<smem>>
    %81 = vector.broadcast %80 : f32 to vector<1x128xf32>
    %82 = arith.mulf %81, %79 : vector<1x128xf32>
    %83 = arith.addf %65, %82 : vector<1x128xf32>
    %c33 = arith.constant 33 : index
    %84 = memref.load %arg3[%c33] : memref<144xf32, #tpu.memory_space<smem>>
    %85 = vector.broadcast %84 : f32 to vector<1x128xf32>
    %86 = arith.mulf %85, %79 : vector<1x128xf32>
    %87 = arith.addf %69, %86 : vector<1x128xf32>
    %c34 = arith.constant 34 : index
    %88 = memref.load %arg3[%c34] : memref<144xf32, #tpu.memory_space<smem>>
    %89 = vector.broadcast %88 : f32 to vector<1x128xf32>
    %90 = arith.mulf %89, %79 : vector<1x128xf32>
    %91 = arith.addf %73, %90 : vector<1x128xf32>
    %c35 = arith.constant 35 : index
    %92 = memref.load %arg3[%c35] : memref<144xf32, #tpu.memory_space<smem>>
    %93 = vector.broadcast %92 : f32 to vector<1x128xf32>
    %94 = arith.mulf %93, %79 : vector<1x128xf32>
    %95 = arith.addf %77, %94 : vector<1x128xf32>
    %96 = vector.extract_strided_slice %1 {offsets = [0, 16], sizes = [1, 128], strides = [1, 1]} : vector<4x162xf32> to vector<1x128xf32>
    %97 = arith.mulf %96, %22 : vector<1x128xf32>
    %c48 = arith.constant 48 : index
    %98 = memref.load %arg3[%c48] : memref<144xf32, #tpu.memory_space<smem>>
    %99 = vector.broadcast %98 : f32 to vector<1x128xf32>
    %100 = arith.mulf %99, %97 : vector<1x128xf32>
    %101 = arith.addf %83, %100 : vector<1x128xf32>
    %c49 = arith.constant 49 : index
    %102 = memref.load %arg3[%c49] : memref<144xf32, #tpu.memory_space<smem>>
    %103 = vector.broadcast %102 : f32 to vector<1x128xf32>
    %104 = arith.mulf %103, %97 : vector<1x128xf32>
    %105 = arith.addf %87, %104 : vector<1x128xf32>
    %c50 = arith.constant 50 : index
    %106 = memref.load %arg3[%c50] : memref<144xf32, #tpu.memory_space<smem>>
    %107 = vector.broadcast %106 : f32 to vector<1x128xf32>
    %108 = arith.mulf %107, %97 : vector<1x128xf32>
    %109 = arith.addf %91, %108 : vector<1x128xf32>
    %c51 = arith.constant 51 : index
    %110 = memref.load %arg3[%c51] : memref<144xf32, #tpu.memory_space<smem>>
    %111 = vector.broadcast %110 : f32 to vector<1x128xf32>
    %112 = arith.mulf %111, %97 : vector<1x128xf32>
    %113 = arith.addf %95, %112 : vector<1x128xf32>
    %114 = vector.extract_strided_slice %1 {offsets = [0, 17], sizes = [1, 128], strides = [1, 1]} : vector<4x162xf32> to vector<1x128xf32>
    %c64 = arith.constant 64 : index
    %115 = memref.load %arg3[%c64] : memref<144xf32, #tpu.memory_space<smem>>
    %116 = vector.broadcast %115 : f32 to vector<1x128xf32>
    %117 = arith.mulf %116, %114 : vector<1x128xf32>
    %118 = arith.addf %101, %117 : vector<1x128xf32>
    %c65 = arith.constant 65 : index
    %119 = memref.load %arg3[%c65] : memref<144xf32, #tpu.memory_space<smem>>
    %120 = vector.broadcast %119 : f32 to vector<1x128xf32>
    %121 = arith.mulf %120, %114 : vector<1x128xf32>
    %122 = arith.addf %105, %121 : vector<1x128xf32>
    %c66 = arith.constant 66 : index
    %123 = memref.load %arg3[%c66] : memref<144xf32, #tpu.memory_space<smem>>
    %124 = vector.broadcast %123 : f32 to vector<1x128xf32>
    %125 = arith.mulf %124, %114 : vector<1x128xf32>
    %126 = arith.addf %109, %125 : vector<1x128xf32>
    %c67 = arith.constant 67 : index
    %127 = memref.load %arg3[%c67] : memref<144xf32, #tpu.memory_space<smem>>
    %128 = vector.broadcast %127 : f32 to vector<1x128xf32>
    %129 = arith.mulf %128, %114 : vector<1x128xf32>
    %130 = arith.addf %113, %129 : vector<1x128xf32>
    %131 = vector.extract_strided_slice %1 {offsets = [0, 18], sizes = [1, 128], strides = [1, 1]} : vector<4x162xf32> to vector<1x128xf32>
    %132 = arith.mulf %131, %26 : vector<1x128xf32>
    %c80 = arith.constant 80 : index
    %133 = memref.load %arg3[%c80] : memref<144xf32, #tpu.memory_space<smem>>
    %134 = vector.broadcast %133 : f32 to vector<1x128xf32>
    %135 = arith.mulf %134, %132 : vector<1x128xf32>
    %136 = arith.addf %118, %135 : vector<1x128xf32>
    %c81 = arith.constant 81 : index
    %137 = memref.load %arg3[%c81] : memref<144xf32, #tpu.memory_space<smem>>
    %138 = vector.broadcast %137 : f32 to vector<1x128xf32>
    %139 = arith.mulf %138, %132 : vector<1x128xf32>
    %140 = arith.addf %122, %139 : vector<1x128xf32>
    %c82 = arith.constant 82 : index
    %141 = memref.load %arg3[%c82] : memref<144xf32, #tpu.memory_space<smem>>
    %142 = vector.broadcast %141 : f32 to vector<1x128xf32>
    %143 = arith.mulf %142, %132 : vector<1x128xf32>
    %144 = arith.addf %126, %143 : vector<1x128xf32>
    %c83 = arith.constant 83 : index
    %145 = memref.load %arg3[%c83] : memref<144xf32, #tpu.memory_space<smem>>
    %146 = vector.broadcast %145 : f32 to vector<1x128xf32>
    %147 = arith.mulf %146, %132 : vector<1x128xf32>
    %148 = arith.addf %130, %147 : vector<1x128xf32>
    %149 = vector.extract_strided_slice %1 {offsets = [0, 32], sizes = [1, 128], strides = [1, 1]} : vector<4x162xf32> to vector<1x128xf32>
    %150 = arith.mulf %149, %22 : vector<1x128xf32>
    %c96 = arith.constant 96 : index
    %151 = memref.load %arg3[%c96] : memref<144xf32, #tpu.memory_space<smem>>
    %152 = vector.broadcast %151 : f32 to vector<1x128xf32>
    %153 = arith.mulf %152, %150 : vector<1x128xf32>
    %154 = arith.addf %136, %153 : vector<1x128xf32>
    %c97 = arith.constant 97 : index
    %155 = memref.load %arg3[%c97] : memref<144xf32, #tpu.memory_space<smem>>
    %156 = vector.broadcast %155 : f32 to vector<1x128xf32>
    %157 = arith.mulf %156, %150 : vector<1x128xf32>
    %158 = arith.addf %140, %157 : vector<1x128xf32>
    %c98 = arith.constant 98 : index
    %159 = memref.load %arg3[%c98] : memref<144xf32, #tpu.memory_space<smem>>
    %160 = vector.broadcast %159 : f32 to vector<1x128xf32>
    %161 = arith.mulf %160, %150 : vector<1x128xf32>
    %162 = arith.addf %144, %161 : vector<1x128xf32>
    %c99 = arith.constant 99 : index
    %163 = memref.load %arg3[%c99] : memref<144xf32, #tpu.memory_space<smem>>
    %164 = vector.broadcast %163 : f32 to vector<1x128xf32>
    %165 = arith.mulf %164, %150 : vector<1x128xf32>
    %166 = arith.addf %148, %165 : vector<1x128xf32>
    %167 = vector.extract_strided_slice %1 {offsets = [0, 33], sizes = [1, 128], strides = [1, 1]} : vector<4x162xf32> to vector<1x128xf32>
    %c112 = arith.constant 112 : index
    %168 = memref.load %arg3[%c112] : memref<144xf32, #tpu.memory_space<smem>>
    %169 = vector.broadcast %168 : f32 to vector<1x128xf32>
    %170 = arith.mulf %169, %167 : vector<1x128xf32>
    %171 = arith.addf %154, %170 : vector<1x128xf32>
    %c113 = arith.constant 113 : index
    %172 = memref.load %arg3[%c113] : memref<144xf32, #tpu.memory_space<smem>>
    %173 = vector.broadcast %172 : f32 to vector<1x128xf32>
    %174 = arith.mulf %173, %167 : vector<1x128xf32>
    %175 = arith.addf %158, %174 : vector<1x128xf32>
    %c114 = arith.constant 114 : index
    %176 = memref.load %arg3[%c114] : memref<144xf32, #tpu.memory_space<smem>>
    %177 = vector.broadcast %176 : f32 to vector<1x128xf32>
    %178 = arith.mulf %177, %167 : vector<1x128xf32>
    %179 = arith.addf %162, %178 : vector<1x128xf32>
    %c115 = arith.constant 115 : index
    %180 = memref.load %arg3[%c115] : memref<144xf32, #tpu.memory_space<smem>>
    %181 = vector.broadcast %180 : f32 to vector<1x128xf32>
    %182 = arith.mulf %181, %167 : vector<1x128xf32>
    %183 = arith.addf %166, %182 : vector<1x128xf32>
    %184 = vector.extract_strided_slice %1 {offsets = [0, 34], sizes = [1, 128], strides = [1, 1]} : vector<4x162xf32> to vector<1x128xf32>
    %185 = arith.mulf %184, %26 : vector<1x128xf32>
    %c128 = arith.constant 128 : index
    %186 = memref.load %arg3[%c128] : memref<144xf32, #tpu.memory_space<smem>>
    %187 = vector.broadcast %186 : f32 to vector<1x128xf32>
    %188 = arith.mulf %187, %185 : vector<1x128xf32>
    %189 = arith.addf %171, %188 : vector<1x128xf32>
    %c129 = arith.constant 129 : index
    %190 = memref.load %arg3[%c129] : memref<144xf32, #tpu.memory_space<smem>>
    %191 = vector.broadcast %190 : f32 to vector<1x128xf32>
    %192 = arith.mulf %191, %185 : vector<1x128xf32>
    %193 = arith.addf %175, %192 : vector<1x128xf32>
    %c130 = arith.constant 130 : index
    %194 = memref.load %arg3[%c130] : memref<144xf32, #tpu.memory_space<smem>>
    %195 = vector.broadcast %194 : f32 to vector<1x128xf32>
    %196 = arith.mulf %195, %185 : vector<1x128xf32>
    %197 = arith.addf %179, %196 : vector<1x128xf32>
    %c131 = arith.constant 131 : index
    %198 = memref.load %arg3[%c131] : memref<144xf32, #tpu.memory_space<smem>>
    %199 = vector.broadcast %198 : f32 to vector<1x128xf32>
    %200 = arith.mulf %199, %185 : vector<1x128xf32>
    %201 = arith.addf %183, %200 : vector<1x128xf32>
    %202 = vector.extract_strided_slice %1 {offsets = [1, 0], sizes = [1, 128], strides = [1, 1]} : vector<4x162xf32> to vector<1x128xf32>
    %203 = arith.mulf %202, %22 : vector<1x128xf32>
    %c4 = arith.constant 4 : index
    %204 = memref.load %arg3[%c4] : memref<144xf32, #tpu.memory_space<smem>>
    %205 = vector.broadcast %204 : f32 to vector<1x128xf32>
    %206 = arith.mulf %205, %203 : vector<1x128xf32>
    %207 = arith.addf %189, %206 : vector<1x128xf32>
    %c5 = arith.constant 5 : index
    %208 = memref.load %arg3[%c5] : memref<144xf32, #tpu.memory_space<smem>>
    %209 = vector.broadcast %208 : f32 to vector<1x128xf32>
    %210 = arith.mulf %209, %203 : vector<1x128xf32>
    %211 = arith.addf %193, %210 : vector<1x128xf32>
    %c6 = arith.constant 6 : index
    %212 = memref.load %arg3[%c6] : memref<144xf32, #tpu.memory_space<smem>>
    %213 = vector.broadcast %212 : f32 to vector<1x128xf32>
    %214 = arith.mulf %213, %203 : vector<1x128xf32>
    %215 = arith.addf %197, %214 : vector<1x128xf32>
    %c7 = arith.constant 7 : index
    %216 = memref.load %arg3[%c7] : memref<144xf32, #tpu.memory_space<smem>>
    %217 = vector.broadcast %216 : f32 to vector<1x128xf32>
    %218 = arith.mulf %217, %203 : vector<1x128xf32>
    %219 = arith.addf %201, %218 : vector<1x128xf32>
    %220 = vector.extract_strided_slice %1 {offsets = [1, 1], sizes = [1, 128], strides = [1, 1]} : vector<4x162xf32> to vector<1x128xf32>
    %c20 = arith.constant 20 : index
    %221 = memref.load %arg3[%c20] : memref<144xf32, #tpu.memory_space<smem>>
    %222 = vector.broadcast %221 : f32 to vector<1x128xf32>
    %223 = arith.mulf %222, %220 : vector<1x128xf32>
    %224 = arith.addf %207, %223 : vector<1x128xf32>
    %c21 = arith.constant 21 : index
    %225 = memref.load %arg3[%c21] : memref<144xf32, #tpu.memory_space<smem>>
    %226 = vector.broadcast %225 : f32 to vector<1x128xf32>
    %227 = arith.mulf %226, %220 : vector<1x128xf32>
    %228 = arith.addf %211, %227 : vector<1x128xf32>
    %c22 = arith.constant 22 : index
    %229 = memref.load %arg3[%c22] : memref<144xf32, #tpu.memory_space<smem>>
    %230 = vector.broadcast %229 : f32 to vector<1x128xf32>
    %231 = arith.mulf %230, %220 : vector<1x128xf32>
    %232 = arith.addf %215, %231 : vector<1x128xf32>
    %c23 = arith.constant 23 : index
    %233 = memref.load %arg3[%c23] : memref<144xf32, #tpu.memory_space<smem>>
    %234 = vector.broadcast %233 : f32 to vector<1x128xf32>
    %235 = arith.mulf %234, %220 : vector<1x128xf32>
    %236 = arith.addf %219, %235 : vector<1x128xf32>
    %237 = vector.extract_strided_slice %1 {offsets = [1, 2], sizes = [1, 128], strides = [1, 1]} : vector<4x162xf32> to vector<1x128xf32>
    %238 = arith.mulf %237, %26 : vector<1x128xf32>
    %c36 = arith.constant 36 : index
    %239 = memref.load %arg3[%c36] : memref<144xf32, #tpu.memory_space<smem>>
    %240 = vector.broadcast %239 : f32 to vector<1x128xf32>
    %241 = arith.mulf %240, %238 : vector<1x128xf32>
    %242 = arith.addf %224, %241 : vector<1x128xf32>
    %c37 = arith.constant 37 : index
    %243 = memref.load %arg3[%c37] : memref<144xf32, #tpu.memory_space<smem>>
    %244 = vector.broadcast %243 : f32 to vector<1x128xf32>
    %245 = arith.mulf %244, %238 : vector<1x128xf32>
    %246 = arith.addf %228, %245 : vector<1x128xf32>
    %c38 = arith.constant 38 : index
    %247 = memref.load %arg3[%c38] : memref<144xf32, #tpu.memory_space<smem>>
    %248 = vector.broadcast %247 : f32 to vector<1x128xf32>
    %249 = arith.mulf %248, %238 : vector<1x128xf32>
    %250 = arith.addf %232, %249 : vector<1x128xf32>
    %c39 = arith.constant 39 : index
    %251 = memref.load %arg3[%c39] : memref<144xf32, #tpu.memory_space<smem>>
    %252 = vector.broadcast %251 : f32 to vector<1x128xf32>
    %253 = arith.mulf %252, %238 : vector<1x128xf32>
    %254 = arith.addf %236, %253 : vector<1x128xf32>
    %255 = vector.extract_strided_slice %1 {offsets = [1, 16], sizes = [1, 128], strides = [1, 1]} : vector<4x162xf32> to vector<1x128xf32>
    %256 = arith.mulf %255, %22 : vector<1x128xf32>
    %c52 = arith.constant 52 : index
    %257 = memref.load %arg3[%c52] : memref<144xf32, #tpu.memory_space<smem>>
    %258 = vector.broadcast %257 : f32 to vector<1x128xf32>
    %259 = arith.mulf %258, %256 : vector<1x128xf32>
    %260 = arith.addf %242, %259 : vector<1x128xf32>
    %c53 = arith.constant 53 : index
    %261 = memref.load %arg3[%c53] : memref<144xf32, #tpu.memory_space<smem>>
    %262 = vector.broadcast %261 : f32 to vector<1x128xf32>
    %263 = arith.mulf %262, %256 : vector<1x128xf32>
    %264 = arith.addf %246, %263 : vector<1x128xf32>
    %c54 = arith.constant 54 : index
    %265 = memref.load %arg3[%c54] : memref<144xf32, #tpu.memory_space<smem>>
    %266 = vector.broadcast %265 : f32 to vector<1x128xf32>
    %267 = arith.mulf %266, %256 : vector<1x128xf32>
    %268 = arith.addf %250, %267 : vector<1x128xf32>
    %c55 = arith.constant 55 : index
    %269 = memref.load %arg3[%c55] : memref<144xf32, #tpu.memory_space<smem>>
    %270 = vector.broadcast %269 : f32 to vector<1x128xf32>
    %271 = arith.mulf %270, %256 : vector<1x128xf32>
    %272 = arith.addf %254, %271 : vector<1x128xf32>
    %273 = vector.extract_strided_slice %1 {offsets = [1, 17], sizes = [1, 128], strides = [1, 1]} : vector<4x162xf32> to vector<1x128xf32>
    %c68 = arith.constant 68 : index
    %274 = memref.load %arg3[%c68] : memref<144xf32, #tpu.memory_space<smem>>
    %275 = vector.broadcast %274 : f32 to vector<1x128xf32>
    %276 = arith.mulf %275, %273 : vector<1x128xf32>
    %277 = arith.addf %260, %276 : vector<1x128xf32>
    %c69 = arith.constant 69 : index
    %278 = memref.load %arg3[%c69] : memref<144xf32, #tpu.memory_space<smem>>
    %279 = vector.broadcast %278 : f32 to vector<1x128xf32>
    %280 = arith.mulf %279, %273 : vector<1x128xf32>
    %281 = arith.addf %264, %280 : vector<1x128xf32>
    %c70 = arith.constant 70 : index
    %282 = memref.load %arg3[%c70] : memref<144xf32, #tpu.memory_space<smem>>
    %283 = vector.broadcast %282 : f32 to vector<1x128xf32>
    %284 = arith.mulf %283, %273 : vector<1x128xf32>
    %285 = arith.addf %268, %284 : vector<1x128xf32>
    %c71 = arith.constant 71 : index
    %286 = memref.load %arg3[%c71] : memref<144xf32, #tpu.memory_space<smem>>
    %287 = vector.broadcast %286 : f32 to vector<1x128xf32>
    %288 = arith.mulf %287, %273 : vector<1x128xf32>
    %289 = arith.addf %272, %288 : vector<1x128xf32>
    %290 = vector.extract_strided_slice %1 {offsets = [1, 18], sizes = [1, 128], strides = [1, 1]} : vector<4x162xf32> to vector<1x128xf32>
    %291 = arith.mulf %290, %26 : vector<1x128xf32>
    %c84 = arith.constant 84 : index
    %292 = memref.load %arg3[%c84] : memref<144xf32, #tpu.memory_space<smem>>
    %293 = vector.broadcast %292 : f32 to vector<1x128xf32>
    %294 = arith.mulf %293, %291 : vector<1x128xf32>
    %295 = arith.addf %277, %294 : vector<1x128xf32>
    %c85 = arith.constant 85 : index
    %296 = memref.load %arg3[%c85] : memref<144xf32, #tpu.memory_space<smem>>
    %297 = vector.broadcast %296 : f32 to vector<1x128xf32>
    %298 = arith.mulf %297, %291 : vector<1x128xf32>
    %299 = arith.addf %281, %298 : vector<1x128xf32>
    %c86 = arith.constant 86 : index
    %300 = memref.load %arg3[%c86] : memref<144xf32, #tpu.memory_space<smem>>
    %301 = vector.broadcast %300 : f32 to vector<1x128xf32>
    %302 = arith.mulf %301, %291 : vector<1x128xf32>
    %303 = arith.addf %285, %302 : vector<1x128xf32>
    %c87 = arith.constant 87 : index
    %304 = memref.load %arg3[%c87] : memref<144xf32, #tpu.memory_space<smem>>
    %305 = vector.broadcast %304 : f32 to vector<1x128xf32>
    %306 = arith.mulf %305, %291 : vector<1x128xf32>
    %307 = arith.addf %289, %306 : vector<1x128xf32>
    %308 = vector.extract_strided_slice %1 {offsets = [1, 32], sizes = [1, 128], strides = [1, 1]} : vector<4x162xf32> to vector<1x128xf32>
    %309 = arith.mulf %308, %22 : vector<1x128xf32>
    %c100 = arith.constant 100 : index
    %310 = memref.load %arg3[%c100] : memref<144xf32, #tpu.memory_space<smem>>
    %311 = vector.broadcast %310 : f32 to vector<1x128xf32>
    %312 = arith.mulf %311, %309 : vector<1x128xf32>
    %313 = arith.addf %295, %312 : vector<1x128xf32>
    %c101 = arith.constant 101 : index
    %314 = memref.load %arg3[%c101] : memref<144xf32, #tpu.memory_space<smem>>
    %315 = vector.broadcast %314 : f32 to vector<1x128xf32>
    %316 = arith.mulf %315, %309 : vector<1x128xf32>
    %317 = arith.addf %299, %316 : vector<1x128xf32>
    %c102 = arith.constant 102 : index
    %318 = memref.load %arg3[%c102] : memref<144xf32, #tpu.memory_space<smem>>
    %319 = vector.broadcast %318 : f32 to vector<1x128xf32>
    %320 = arith.mulf %319, %309 : vector<1x128xf32>
    %321 = arith.addf %303, %320 : vector<1x128xf32>
    %c103 = arith.constant 103 : index
    %322 = memref.load %arg3[%c103] : memref<144xf32, #tpu.memory_space<smem>>
    %323 = vector.broadcast %322 : f32 to vector<1x128xf32>
    %324 = arith.mulf %323, %309 : vector<1x128xf32>
    %325 = arith.addf %307, %324 : vector<1x128xf32>
    %326 = vector.extract_strided_slice %1 {offsets = [1, 33], sizes = [1, 128], strides = [1, 1]} : vector<4x162xf32> to vector<1x128xf32>
    %c116 = arith.constant 116 : index
    %327 = memref.load %arg3[%c116] : memref<144xf32, #tpu.memory_space<smem>>
    %328 = vector.broadcast %327 : f32 to vector<1x128xf32>
    %329 = arith.mulf %328, %326 : vector<1x128xf32>
    %330 = arith.addf %313, %329 : vector<1x128xf32>
    %c117 = arith.constant 117 : index
    %331 = memref.load %arg3[%c117] : memref<144xf32, #tpu.memory_space<smem>>
    %332 = vector.broadcast %331 : f32 to vector<1x128xf32>
    %333 = arith.mulf %332, %326 : vector<1x128xf32>
    %334 = arith.addf %317, %333 : vector<1x128xf32>
    %c118 = arith.constant 118 : index
    %335 = memref.load %arg3[%c118] : memref<144xf32, #tpu.memory_space<smem>>
    %336 = vector.broadcast %335 : f32 to vector<1x128xf32>
    %337 = arith.mulf %336, %326 : vector<1x128xf32>
    %338 = arith.addf %321, %337 : vector<1x128xf32>
    %c119 = arith.constant 119 : index
    %339 = memref.load %arg3[%c119] : memref<144xf32, #tpu.memory_space<smem>>
    %340 = vector.broadcast %339 : f32 to vector<1x128xf32>
    %341 = arith.mulf %340, %326 : vector<1x128xf32>
    %342 = arith.addf %325, %341 : vector<1x128xf32>
    %343 = vector.extract_strided_slice %1 {offsets = [1, 34], sizes = [1, 128], strides = [1, 1]} : vector<4x162xf32> to vector<1x128xf32>
    %344 = arith.mulf %343, %26 : vector<1x128xf32>
    %c132 = arith.constant 132 : index
    %345 = memref.load %arg3[%c132] : memref<144xf32, #tpu.memory_space<smem>>
    %346 = vector.broadcast %345 : f32 to vector<1x128xf32>
    %347 = arith.mulf %346, %344 : vector<1x128xf32>
    %348 = arith.addf %330, %347 : vector<1x128xf32>
    %c133 = arith.constant 133 : index
    %349 = memref.load %arg3[%c133] : memref<144xf32, #tpu.memory_space<smem>>
    %350 = vector.broadcast %349 : f32 to vector<1x128xf32>
    %351 = arith.mulf %350, %344 : vector<1x128xf32>
    %352 = arith.addf %334, %351 : vector<1x128xf32>
    %c134 = arith.constant 134 : index
    %353 = memref.load %arg3[%c134] : memref<144xf32, #tpu.memory_space<smem>>
    %354 = vector.broadcast %353 : f32 to vector<1x128xf32>
    %355 = arith.mulf %354, %344 : vector<1x128xf32>
    %356 = arith.addf %338, %355 : vector<1x128xf32>
    %c135 = arith.constant 135 : index
    %357 = memref.load %arg3[%c135] : memref<144xf32, #tpu.memory_space<smem>>
    %358 = vector.broadcast %357 : f32 to vector<1x128xf32>
    %359 = arith.mulf %358, %344 : vector<1x128xf32>
    %360 = arith.addf %342, %359 : vector<1x128xf32>
    %361 = vector.extract_strided_slice %1 {offsets = [2, 0], sizes = [1, 128], strides = [1, 1]} : vector<4x162xf32> to vector<1x128xf32>
    %362 = arith.mulf %361, %22 : vector<1x128xf32>
    %c8 = arith.constant 8 : index
    %363 = memref.load %arg3[%c8] : memref<144xf32, #tpu.memory_space<smem>>
    %364 = vector.broadcast %363 : f32 to vector<1x128xf32>
    %365 = arith.mulf %364, %362 : vector<1x128xf32>
    %366 = arith.addf %348, %365 : vector<1x128xf32>
    %c9 = arith.constant 9 : index
    %367 = memref.load %arg3[%c9] : memref<144xf32, #tpu.memory_space<smem>>
    %368 = vector.broadcast %367 : f32 to vector<1x128xf32>
    %369 = arith.mulf %368, %362 : vector<1x128xf32>
    %370 = arith.addf %352, %369 : vector<1x128xf32>
    %c10 = arith.constant 10 : index
    %371 = memref.load %arg3[%c10] : memref<144xf32, #tpu.memory_space<smem>>
    %372 = vector.broadcast %371 : f32 to vector<1x128xf32>
    %373 = arith.mulf %372, %362 : vector<1x128xf32>
    %374 = arith.addf %356, %373 : vector<1x128xf32>
    %c11 = arith.constant 11 : index
    %375 = memref.load %arg3[%c11] : memref<144xf32, #tpu.memory_space<smem>>
    %376 = vector.broadcast %375 : f32 to vector<1x128xf32>
    %377 = arith.mulf %376, %362 : vector<1x128xf32>
    %378 = arith.addf %360, %377 : vector<1x128xf32>
    %379 = vector.extract_strided_slice %1 {offsets = [2, 1], sizes = [1, 128], strides = [1, 1]} : vector<4x162xf32> to vector<1x128xf32>
    %c24 = arith.constant 24 : index
    %380 = memref.load %arg3[%c24] : memref<144xf32, #tpu.memory_space<smem>>
    %381 = vector.broadcast %380 : f32 to vector<1x128xf32>
    %382 = arith.mulf %381, %379 : vector<1x128xf32>
    %383 = arith.addf %366, %382 : vector<1x128xf32>
    %c25 = arith.constant 25 : index
    %384 = memref.load %arg3[%c25] : memref<144xf32, #tpu.memory_space<smem>>
    %385 = vector.broadcast %384 : f32 to vector<1x128xf32>
    %386 = arith.mulf %385, %379 : vector<1x128xf32>
    %387 = arith.addf %370, %386 : vector<1x128xf32>
    %c26 = arith.constant 26 : index
    %388 = memref.load %arg3[%c26] : memref<144xf32, #tpu.memory_space<smem>>
    %389 = vector.broadcast %388 : f32 to vector<1x128xf32>
    %390 = arith.mulf %389, %379 : vector<1x128xf32>
    %391 = arith.addf %374, %390 : vector<1x128xf32>
    %c27 = arith.constant 27 : index
    %392 = memref.load %arg3[%c27] : memref<144xf32, #tpu.memory_space<smem>>
    %393 = vector.broadcast %392 : f32 to vector<1x128xf32>
    %394 = arith.mulf %393, %379 : vector<1x128xf32>
    %395 = arith.addf %378, %394 : vector<1x128xf32>
    %396 = vector.extract_strided_slice %1 {offsets = [2, 2], sizes = [1, 128], strides = [1, 1]} : vector<4x162xf32> to vector<1x128xf32>
    %397 = arith.mulf %396, %26 : vector<1x128xf32>
    %c40 = arith.constant 40 : index
    %398 = memref.load %arg3[%c40] : memref<144xf32, #tpu.memory_space<smem>>
    %399 = vector.broadcast %398 : f32 to vector<1x128xf32>
    %400 = arith.mulf %399, %397 : vector<1x128xf32>
    %401 = arith.addf %383, %400 : vector<1x128xf32>
    %c41 = arith.constant 41 : index
    %402 = memref.load %arg3[%c41] : memref<144xf32, #tpu.memory_space<smem>>
    %403 = vector.broadcast %402 : f32 to vector<1x128xf32>
    %404 = arith.mulf %403, %397 : vector<1x128xf32>
    %405 = arith.addf %387, %404 : vector<1x128xf32>
    %c42 = arith.constant 42 : index
    %406 = memref.load %arg3[%c42] : memref<144xf32, #tpu.memory_space<smem>>
    %407 = vector.broadcast %406 : f32 to vector<1x128xf32>
    %408 = arith.mulf %407, %397 : vector<1x128xf32>
    %409 = arith.addf %391, %408 : vector<1x128xf32>
    %c43 = arith.constant 43 : index
    %410 = memref.load %arg3[%c43] : memref<144xf32, #tpu.memory_space<smem>>
    %411 = vector.broadcast %410 : f32 to vector<1x128xf32>
    %412 = arith.mulf %411, %397 : vector<1x128xf32>
    %413 = arith.addf %395, %412 : vector<1x128xf32>
    %414 = vector.extract_strided_slice %1 {offsets = [2, 16], sizes = [1, 128], strides = [1, 1]} : vector<4x162xf32> to vector<1x128xf32>
    %415 = arith.mulf %414, %22 : vector<1x128xf32>
    %c56 = arith.constant 56 : index
    %416 = memref.load %arg3[%c56] : memref<144xf32, #tpu.memory_space<smem>>
    %417 = vector.broadcast %416 : f32 to vector<1x128xf32>
    %418 = arith.mulf %417, %415 : vector<1x128xf32>
    %419 = arith.addf %401, %418 : vector<1x128xf32>
    %c57 = arith.constant 57 : index
    %420 = memref.load %arg3[%c57] : memref<144xf32, #tpu.memory_space<smem>>
    %421 = vector.broadcast %420 : f32 to vector<1x128xf32>
    %422 = arith.mulf %421, %415 : vector<1x128xf32>
    %423 = arith.addf %405, %422 : vector<1x128xf32>
    %c58 = arith.constant 58 : index
    %424 = memref.load %arg3[%c58] : memref<144xf32, #tpu.memory_space<smem>>
    %425 = vector.broadcast %424 : f32 to vector<1x128xf32>
    %426 = arith.mulf %425, %415 : vector<1x128xf32>
    %427 = arith.addf %409, %426 : vector<1x128xf32>
    %c59 = arith.constant 59 : index
    %428 = memref.load %arg3[%c59] : memref<144xf32, #tpu.memory_space<smem>>
    %429 = vector.broadcast %428 : f32 to vector<1x128xf32>
    %430 = arith.mulf %429, %415 : vector<1x128xf32>
    %431 = arith.addf %413, %430 : vector<1x128xf32>
    %432 = vector.extract_strided_slice %1 {offsets = [2, 17], sizes = [1, 128], strides = [1, 1]} : vector<4x162xf32> to vector<1x128xf32>
    %c72 = arith.constant 72 : index
    %433 = memref.load %arg3[%c72] : memref<144xf32, #tpu.memory_space<smem>>
    %434 = vector.broadcast %433 : f32 to vector<1x128xf32>
    %435 = arith.mulf %434, %432 : vector<1x128xf32>
    %436 = arith.addf %419, %435 : vector<1x128xf32>
    %c73 = arith.constant 73 : index
    %437 = memref.load %arg3[%c73] : memref<144xf32, #tpu.memory_space<smem>>
    %438 = vector.broadcast %437 : f32 to vector<1x128xf32>
    %439 = arith.mulf %438, %432 : vector<1x128xf32>
    %440 = arith.addf %423, %439 : vector<1x128xf32>
    %c74 = arith.constant 74 : index
    %441 = memref.load %arg3[%c74] : memref<144xf32, #tpu.memory_space<smem>>
    %442 = vector.broadcast %441 : f32 to vector<1x128xf32>
    %443 = arith.mulf %442, %432 : vector<1x128xf32>
    %444 = arith.addf %427, %443 : vector<1x128xf32>
    %c75 = arith.constant 75 : index
    %445 = memref.load %arg3[%c75] : memref<144xf32, #tpu.memory_space<smem>>
    %446 = vector.broadcast %445 : f32 to vector<1x128xf32>
    %447 = arith.mulf %446, %432 : vector<1x128xf32>
    %448 = arith.addf %431, %447 : vector<1x128xf32>
    %449 = vector.extract_strided_slice %1 {offsets = [2, 18], sizes = [1, 128], strides = [1, 1]} : vector<4x162xf32> to vector<1x128xf32>
    %450 = arith.mulf %449, %26 : vector<1x128xf32>
    %c88 = arith.constant 88 : index
    %451 = memref.load %arg3[%c88] : memref<144xf32, #tpu.memory_space<smem>>
    %452 = vector.broadcast %451 : f32 to vector<1x128xf32>
    %453 = arith.mulf %452, %450 : vector<1x128xf32>
    %454 = arith.addf %436, %453 : vector<1x128xf32>
    %c89 = arith.constant 89 : index
    %455 = memref.load %arg3[%c89] : memref<144xf32, #tpu.memory_space<smem>>
    %456 = vector.broadcast %455 : f32 to vector<1x128xf32>
    %457 = arith.mulf %456, %450 : vector<1x128xf32>
    %458 = arith.addf %440, %457 : vector<1x128xf32>
    %c90 = arith.constant 90 : index
    %459 = memref.load %arg3[%c90] : memref<144xf32, #tpu.memory_space<smem>>
    %460 = vector.broadcast %459 : f32 to vector<1x128xf32>
    %461 = arith.mulf %460, %450 : vector<1x128xf32>
    %462 = arith.addf %444, %461 : vector<1x128xf32>
    %c91 = arith.constant 91 : index
    %463 = memref.load %arg3[%c91] : memref<144xf32, #tpu.memory_space<smem>>
    %464 = vector.broadcast %463 : f32 to vector<1x128xf32>
    %465 = arith.mulf %464, %450 : vector<1x128xf32>
    %466 = arith.addf %448, %465 : vector<1x128xf32>
    %467 = vector.extract_strided_slice %1 {offsets = [2, 32], sizes = [1, 128], strides = [1, 1]} : vector<4x162xf32> to vector<1x128xf32>
    %468 = arith.mulf %467, %22 : vector<1x128xf32>
    %c104 = arith.constant 104 : index
    %469 = memref.load %arg3[%c104] : memref<144xf32, #tpu.memory_space<smem>>
    %470 = vector.broadcast %469 : f32 to vector<1x128xf32>
    %471 = arith.mulf %470, %468 : vector<1x128xf32>
    %472 = arith.addf %454, %471 : vector<1x128xf32>
    %c105 = arith.constant 105 : index
    %473 = memref.load %arg3[%c105] : memref<144xf32, #tpu.memory_space<smem>>
    %474 = vector.broadcast %473 : f32 to vector<1x128xf32>
    %475 = arith.mulf %474, %468 : vector<1x128xf32>
    %476 = arith.addf %458, %475 : vector<1x128xf32>
    %c106 = arith.constant 106 : index
    %477 = memref.load %arg3[%c106] : memref<144xf32, #tpu.memory_space<smem>>
    %478 = vector.broadcast %477 : f32 to vector<1x128xf32>
    %479 = arith.mulf %478, %468 : vector<1x128xf32>
    %480 = arith.addf %462, %479 : vector<1x128xf32>
    %c107 = arith.constant 107 : index
    %481 = memref.load %arg3[%c107] : memref<144xf32, #tpu.memory_space<smem>>
    %482 = vector.broadcast %481 : f32 to vector<1x128xf32>
    %483 = arith.mulf %482, %468 : vector<1x128xf32>
    %484 = arith.addf %466, %483 : vector<1x128xf32>
    %485 = vector.extract_strided_slice %1 {offsets = [2, 33], sizes = [1, 128], strides = [1, 1]} : vector<4x162xf32> to vector<1x128xf32>
    %c120 = arith.constant 120 : index
    %486 = memref.load %arg3[%c120] : memref<144xf32, #tpu.memory_space<smem>>
    %487 = vector.broadcast %486 : f32 to vector<1x128xf32>
    %488 = arith.mulf %487, %485 : vector<1x128xf32>
    %489 = arith.addf %472, %488 : vector<1x128xf32>
    %c121 = arith.constant 121 : index
    %490 = memref.load %arg3[%c121] : memref<144xf32, #tpu.memory_space<smem>>
    %491 = vector.broadcast %490 : f32 to vector<1x128xf32>
    %492 = arith.mulf %491, %485 : vector<1x128xf32>
    %493 = arith.addf %476, %492 : vector<1x128xf32>
    %c122 = arith.constant 122 : index
    %494 = memref.load %arg3[%c122] : memref<144xf32, #tpu.memory_space<smem>>
    %495 = vector.broadcast %494 : f32 to vector<1x128xf32>
    %496 = arith.mulf %495, %485 : vector<1x128xf32>
    %497 = arith.addf %480, %496 : vector<1x128xf32>
    %c123 = arith.constant 123 : index
    %498 = memref.load %arg3[%c123] : memref<144xf32, #tpu.memory_space<smem>>
    %499 = vector.broadcast %498 : f32 to vector<1x128xf32>
    %500 = arith.mulf %499, %485 : vector<1x128xf32>
    %501 = arith.addf %484, %500 : vector<1x128xf32>
    %502 = vector.extract_strided_slice %1 {offsets = [2, 34], sizes = [1, 128], strides = [1, 1]} : vector<4x162xf32> to vector<1x128xf32>
    %503 = arith.mulf %502, %26 : vector<1x128xf32>
    %c136 = arith.constant 136 : index
    %504 = memref.load %arg3[%c136] : memref<144xf32, #tpu.memory_space<smem>>
    %505 = vector.broadcast %504 : f32 to vector<1x128xf32>
    %506 = arith.mulf %505, %503 : vector<1x128xf32>
    %507 = arith.addf %489, %506 : vector<1x128xf32>
    %c137 = arith.constant 137 : index
    %508 = memref.load %arg3[%c137] : memref<144xf32, #tpu.memory_space<smem>>
    %509 = vector.broadcast %508 : f32 to vector<1x128xf32>
    %510 = arith.mulf %509, %503 : vector<1x128xf32>
    %511 = arith.addf %493, %510 : vector<1x128xf32>
    %c138 = arith.constant 138 : index
    %512 = memref.load %arg3[%c138] : memref<144xf32, #tpu.memory_space<smem>>
    %513 = vector.broadcast %512 : f32 to vector<1x128xf32>
    %514 = arith.mulf %513, %503 : vector<1x128xf32>
    %515 = arith.addf %497, %514 : vector<1x128xf32>
    %c139 = arith.constant 139 : index
    %516 = memref.load %arg3[%c139] : memref<144xf32, #tpu.memory_space<smem>>
    %517 = vector.broadcast %516 : f32 to vector<1x128xf32>
    %518 = arith.mulf %517, %503 : vector<1x128xf32>
    %519 = arith.addf %501, %518 : vector<1x128xf32>
    %520 = vector.extract_strided_slice %1 {offsets = [3, 0], sizes = [1, 128], strides = [1, 1]} : vector<4x162xf32> to vector<1x128xf32>
    %521 = arith.mulf %520, %22 : vector<1x128xf32>
    %c12 = arith.constant 12 : index
    %522 = memref.load %arg3[%c12] : memref<144xf32, #tpu.memory_space<smem>>
    %523 = vector.broadcast %522 : f32 to vector<1x128xf32>
    %524 = arith.mulf %523, %521 : vector<1x128xf32>
    %525 = arith.addf %507, %524 : vector<1x128xf32>
    %c13 = arith.constant 13 : index
    %526 = memref.load %arg3[%c13] : memref<144xf32, #tpu.memory_space<smem>>
    %527 = vector.broadcast %526 : f32 to vector<1x128xf32>
    %528 = arith.mulf %527, %521 : vector<1x128xf32>
    %529 = arith.addf %511, %528 : vector<1x128xf32>
    %c14 = arith.constant 14 : index
    %530 = memref.load %arg3[%c14] : memref<144xf32, #tpu.memory_space<smem>>
    %531 = vector.broadcast %530 : f32 to vector<1x128xf32>
    %532 = arith.mulf %531, %521 : vector<1x128xf32>
    %533 = arith.addf %515, %532 : vector<1x128xf32>
    %c15 = arith.constant 15 : index
    %534 = memref.load %arg3[%c15] : memref<144xf32, #tpu.memory_space<smem>>
    %535 = vector.broadcast %534 : f32 to vector<1x128xf32>
    %536 = arith.mulf %535, %521 : vector<1x128xf32>
    %537 = arith.addf %519, %536 : vector<1x128xf32>
    %538 = vector.extract_strided_slice %1 {offsets = [3, 1], sizes = [1, 128], strides = [1, 1]} : vector<4x162xf32> to vector<1x128xf32>
    %c28 = arith.constant 28 : index
    %539 = memref.load %arg3[%c28] : memref<144xf32, #tpu.memory_space<smem>>
    %540 = vector.broadcast %539 : f32 to vector<1x128xf32>
    %541 = arith.mulf %540, %538 : vector<1x128xf32>
    %542 = arith.addf %525, %541 : vector<1x128xf32>
    %c29 = arith.constant 29 : index
    %543 = memref.load %arg3[%c29] : memref<144xf32, #tpu.memory_space<smem>>
    %544 = vector.broadcast %543 : f32 to vector<1x128xf32>
    %545 = arith.mulf %544, %538 : vector<1x128xf32>
    %546 = arith.addf %529, %545 : vector<1x128xf32>
    %c30 = arith.constant 30 : index
    %547 = memref.load %arg3[%c30] : memref<144xf32, #tpu.memory_space<smem>>
    %548 = vector.broadcast %547 : f32 to vector<1x128xf32>
    %549 = arith.mulf %548, %538 : vector<1x128xf32>
    %550 = arith.addf %533, %549 : vector<1x128xf32>
    %c31 = arith.constant 31 : index
    %551 = memref.load %arg3[%c31] : memref<144xf32, #tpu.memory_space<smem>>
    %552 = vector.broadcast %551 : f32 to vector<1x128xf32>
    %553 = arith.mulf %552, %538 : vector<1x128xf32>
    %554 = arith.addf %537, %553 : vector<1x128xf32>
    %555 = vector.extract_strided_slice %1 {offsets = [3, 2], sizes = [1, 128], strides = [1, 1]} : vector<4x162xf32> to vector<1x128xf32>
    %556 = arith.mulf %555, %26 : vector<1x128xf32>
    %c44 = arith.constant 44 : index
    %557 = memref.load %arg3[%c44] : memref<144xf32, #tpu.memory_space<smem>>
    %558 = vector.broadcast %557 : f32 to vector<1x128xf32>
    %559 = arith.mulf %558, %556 : vector<1x128xf32>
    %560 = arith.addf %542, %559 : vector<1x128xf32>
    %c45 = arith.constant 45 : index
    %561 = memref.load %arg3[%c45] : memref<144xf32, #tpu.memory_space<smem>>
    %562 = vector.broadcast %561 : f32 to vector<1x128xf32>
    %563 = arith.mulf %562, %556 : vector<1x128xf32>
    %564 = arith.addf %546, %563 : vector<1x128xf32>
    %c46 = arith.constant 46 : index
    %565 = memref.load %arg3[%c46] : memref<144xf32, #tpu.memory_space<smem>>
    %566 = vector.broadcast %565 : f32 to vector<1x128xf32>
    %567 = arith.mulf %566, %556 : vector<1x128xf32>
    %568 = arith.addf %550, %567 : vector<1x128xf32>
    %c47 = arith.constant 47 : index
    %569 = memref.load %arg3[%c47] : memref<144xf32, #tpu.memory_space<smem>>
    %570 = vector.broadcast %569 : f32 to vector<1x128xf32>
    %571 = arith.mulf %570, %556 : vector<1x128xf32>
    %572 = arith.addf %554, %571 : vector<1x128xf32>
    %573 = vector.extract_strided_slice %1 {offsets = [3, 16], sizes = [1, 128], strides = [1, 1]} : vector<4x162xf32> to vector<1x128xf32>
    %574 = arith.mulf %573, %22 : vector<1x128xf32>
    %c60 = arith.constant 60 : index
    %575 = memref.load %arg3[%c60] : memref<144xf32, #tpu.memory_space<smem>>
    %576 = vector.broadcast %575 : f32 to vector<1x128xf32>
    %577 = arith.mulf %576, %574 : vector<1x128xf32>
    %578 = arith.addf %560, %577 : vector<1x128xf32>
    %c61 = arith.constant 61 : index
    %579 = memref.load %arg3[%c61] : memref<144xf32, #tpu.memory_space<smem>>
    %580 = vector.broadcast %579 : f32 to vector<1x128xf32>
    %581 = arith.mulf %580, %574 : vector<1x128xf32>
    %582 = arith.addf %564, %581 : vector<1x128xf32>
    %c62 = arith.constant 62 : index
    %583 = memref.load %arg3[%c62] : memref<144xf32, #tpu.memory_space<smem>>
    %584 = vector.broadcast %583 : f32 to vector<1x128xf32>
    %585 = arith.mulf %584, %574 : vector<1x128xf32>
    %586 = arith.addf %568, %585 : vector<1x128xf32>
    %c63 = arith.constant 63 : index
    %587 = memref.load %arg3[%c63] : memref<144xf32, #tpu.memory_space<smem>>
    %588 = vector.broadcast %587 : f32 to vector<1x128xf32>
    %589 = arith.mulf %588, %574 : vector<1x128xf32>
    %590 = arith.addf %572, %589 : vector<1x128xf32>
    %591 = vector.extract_strided_slice %1 {offsets = [3, 17], sizes = [1, 128], strides = [1, 1]} : vector<4x162xf32> to vector<1x128xf32>
    %c76 = arith.constant 76 : index
    %592 = memref.load %arg3[%c76] : memref<144xf32, #tpu.memory_space<smem>>
    %593 = vector.broadcast %592 : f32 to vector<1x128xf32>
    %594 = arith.mulf %593, %591 : vector<1x128xf32>
    %595 = arith.addf %578, %594 : vector<1x128xf32>
    %c77 = arith.constant 77 : index
    %596 = memref.load %arg3[%c77] : memref<144xf32, #tpu.memory_space<smem>>
    %597 = vector.broadcast %596 : f32 to vector<1x128xf32>
    %598 = arith.mulf %597, %591 : vector<1x128xf32>
    %599 = arith.addf %582, %598 : vector<1x128xf32>
    %c78 = arith.constant 78 : index
    %600 = memref.load %arg3[%c78] : memref<144xf32, #tpu.memory_space<smem>>
    %601 = vector.broadcast %600 : f32 to vector<1x128xf32>
    %602 = arith.mulf %601, %591 : vector<1x128xf32>
    %603 = arith.addf %586, %602 : vector<1x128xf32>
    %c79 = arith.constant 79 : index
    %604 = memref.load %arg3[%c79] : memref<144xf32, #tpu.memory_space<smem>>
    %605 = vector.broadcast %604 : f32 to vector<1x128xf32>
    %606 = arith.mulf %605, %591 : vector<1x128xf32>
    %607 = arith.addf %590, %606 : vector<1x128xf32>
    %608 = vector.extract_strided_slice %1 {offsets = [3, 18], sizes = [1, 128], strides = [1, 1]} : vector<4x162xf32> to vector<1x128xf32>
    %609 = arith.mulf %608, %26 : vector<1x128xf32>
    %c92 = arith.constant 92 : index
    %610 = memref.load %arg3[%c92] : memref<144xf32, #tpu.memory_space<smem>>
    %611 = vector.broadcast %610 : f32 to vector<1x128xf32>
    %612 = arith.mulf %611, %609 : vector<1x128xf32>
    %613 = arith.addf %595, %612 : vector<1x128xf32>
    %c93 = arith.constant 93 : index
    %614 = memref.load %arg3[%c93] : memref<144xf32, #tpu.memory_space<smem>>
    %615 = vector.broadcast %614 : f32 to vector<1x128xf32>
    %616 = arith.mulf %615, %609 : vector<1x128xf32>
    %617 = arith.addf %599, %616 : vector<1x128xf32>
    %c94 = arith.constant 94 : index
    %618 = memref.load %arg3[%c94] : memref<144xf32, #tpu.memory_space<smem>>
    %619 = vector.broadcast %618 : f32 to vector<1x128xf32>
    %620 = arith.mulf %619, %609 : vector<1x128xf32>
    %621 = arith.addf %603, %620 : vector<1x128xf32>
    %c95 = arith.constant 95 : index
    %622 = memref.load %arg3[%c95] : memref<144xf32, #tpu.memory_space<smem>>
    %623 = vector.broadcast %622 : f32 to vector<1x128xf32>
    %624 = arith.mulf %623, %609 : vector<1x128xf32>
    %625 = arith.addf %607, %624 : vector<1x128xf32>
    %626 = vector.extract_strided_slice %1 {offsets = [3, 32], sizes = [1, 128], strides = [1, 1]} : vector<4x162xf32> to vector<1x128xf32>
    %627 = arith.mulf %626, %22 : vector<1x128xf32>
    %c108 = arith.constant 108 : index
    %628 = memref.load %arg3[%c108] : memref<144xf32, #tpu.memory_space<smem>>
    %629 = vector.broadcast %628 : f32 to vector<1x128xf32>
    %630 = arith.mulf %629, %627 : vector<1x128xf32>
    %631 = arith.addf %613, %630 : vector<1x128xf32>
    %c109 = arith.constant 109 : index
    %632 = memref.load %arg3[%c109] : memref<144xf32, #tpu.memory_space<smem>>
    %633 = vector.broadcast %632 : f32 to vector<1x128xf32>
    %634 = arith.mulf %633, %627 : vector<1x128xf32>
    %635 = arith.addf %617, %634 : vector<1x128xf32>
    %c110 = arith.constant 110 : index
    %636 = memref.load %arg3[%c110] : memref<144xf32, #tpu.memory_space<smem>>
    %637 = vector.broadcast %636 : f32 to vector<1x128xf32>
    %638 = arith.mulf %637, %627 : vector<1x128xf32>
    %639 = arith.addf %621, %638 : vector<1x128xf32>
    %c111 = arith.constant 111 : index
    %640 = memref.load %arg3[%c111] : memref<144xf32, #tpu.memory_space<smem>>
    %641 = vector.broadcast %640 : f32 to vector<1x128xf32>
    %642 = arith.mulf %641, %627 : vector<1x128xf32>
    %643 = arith.addf %625, %642 : vector<1x128xf32>
    %644 = vector.extract_strided_slice %1 {offsets = [3, 33], sizes = [1, 128], strides = [1, 1]} : vector<4x162xf32> to vector<1x128xf32>
    %c124 = arith.constant 124 : index
    %645 = memref.load %arg3[%c124] : memref<144xf32, #tpu.memory_space<smem>>
    %646 = vector.broadcast %645 : f32 to vector<1x128xf32>
    %647 = arith.mulf %646, %644 : vector<1x128xf32>
    %648 = arith.addf %631, %647 : vector<1x128xf32>
    %c125 = arith.constant 125 : index
    %649 = memref.load %arg3[%c125] : memref<144xf32, #tpu.memory_space<smem>>
    %650 = vector.broadcast %649 : f32 to vector<1x128xf32>
    %651 = arith.mulf %650, %644 : vector<1x128xf32>
    %652 = arith.addf %635, %651 : vector<1x128xf32>
    %c126 = arith.constant 126 : index
    %653 = memref.load %arg3[%c126] : memref<144xf32, #tpu.memory_space<smem>>
    %654 = vector.broadcast %653 : f32 to vector<1x128xf32>
    %655 = arith.mulf %654, %644 : vector<1x128xf32>
    %656 = arith.addf %639, %655 : vector<1x128xf32>
    %c127 = arith.constant 127 : index
    %657 = memref.load %arg3[%c127] : memref<144xf32, #tpu.memory_space<smem>>
    %658 = vector.broadcast %657 : f32 to vector<1x128xf32>
    %659 = arith.mulf %658, %644 : vector<1x128xf32>
    %660 = arith.addf %643, %659 : vector<1x128xf32>
    %661 = vector.extract_strided_slice %1 {offsets = [3, 34], sizes = [1, 128], strides = [1, 1]} : vector<4x162xf32> to vector<1x128xf32>
    %662 = arith.mulf %661, %26 : vector<1x128xf32>
    %c140 = arith.constant 140 : index
    %663 = memref.load %arg3[%c140] : memref<144xf32, #tpu.memory_space<smem>>
    %664 = vector.broadcast %663 : f32 to vector<1x128xf32>
    %665 = arith.mulf %664, %662 : vector<1x128xf32>
    %666 = arith.addf %648, %665 : vector<1x128xf32>
    %c141 = arith.constant 141 : index
    %667 = memref.load %arg3[%c141] : memref<144xf32, #tpu.memory_space<smem>>
    %668 = vector.broadcast %667 : f32 to vector<1x128xf32>
    %669 = arith.mulf %668, %662 : vector<1x128xf32>
    %670 = arith.addf %652, %669 : vector<1x128xf32>
    %c142 = arith.constant 142 : index
    %671 = memref.load %arg3[%c142] : memref<144xf32, #tpu.memory_space<smem>>
    %672 = vector.broadcast %671 : f32 to vector<1x128xf32>
    %673 = arith.mulf %672, %662 : vector<1x128xf32>
    %674 = arith.addf %656, %673 : vector<1x128xf32>
    %c143 = arith.constant 143 : index
    %675 = memref.load %arg3[%c143] : memref<144xf32, #tpu.memory_space<smem>>
    %676 = vector.broadcast %675 : f32 to vector<1x128xf32>
    %677 = arith.mulf %676, %662 : vector<1x128xf32>
    %678 = arith.addf %660, %677 : vector<1x128xf32>
    %679 = tpu.concatenate %666, %670, %674, %678 in 0 : vector<1x128xf32>, vector<1x128xf32>, vector<1x128xf32>, vector<1x128xf32> -> vector<4x128xf32>
    %c0_16 = arith.constant 0 : index
    %c0_17 = arith.constant 0 : index
    %c0_18 = arith.constant 0 : index
    %c0_19 = arith.constant 0 : index
    %680 = vector.load %arg5[%c0_16, %c0_17, %c0_18, %c0_19] : memref<1x1x4x128xf32, #tpu.memory_space<vmem>>, vector<1x1x4x128xf32>
    %681 = vector.shape_cast %680 : vector<1x1x4x128xf32> to vector<4x128xf32>
    %682 = vector.shape_cast %679 : vector<4x128xf32> to vector<1x1x4x128xf32>
    tpu.vector_store %arg5[%c0_16, %c0_17, %c0_18, %c0_19], %682 {strides = array<i32>} : memref<1x1x4x128xf32, #tpu.memory_space<vmem>>, vector<1x1x4x128xf32>,
    return
  }
  func.func @transform_0(%arg0: i32, %arg1: i32) -> (i32, i32, i32, i32) {
    %c0_i32 = arith.constant 0 : i32
    %c0_i32_0 = arith.constant 0 : i32
    %c0_i32_1 = arith.constant 0 : i32
    return %arg0, %arg1, %c0_i32, %c0_i32_0 : i32, i32, i32, i32
  }
  func.func @transform_1(%arg0: i32, %arg1: i32) -> i32 {
    %c0_i32 = arith.constant 0 : i32
    %c0_i32_0 = arith.constant 0 : i32
    return %c0_i32 : i32
  }
  func.func @transform_2(%arg0: i32, %arg1: i32) -> (i32, i32) {
    %c0_i32 = arith.constant 0 : i32
    %c0_i32_0 = arith.constant 0 : i32
    %c0_i32_1 = arith.constant 0 : i32
    return %c0_i32, %c0_i32_0 : i32, i32
  }
  func.func @transform_3(%arg0: i32, %arg1: i32) -> (i32, i32, i32, i32) {
    %c0_i32 = arith.constant 0 : i32
    %c0_i32_0 = arith.constant 0 : i32
    %c0_i32_1 = arith.constant 0 : i32
    return %arg0, %arg1, %c0_i32, %c0_i32_0 : i32, i32, i32, i32
  }
}

</mosaic_0001>

<llo_original>
// kernel: tpu_custom_call.1
$region0: #{tpu_custom_call.1}
  #allocation0 [shape = 'u32[]', space=smem, size = 0x4, offset = 0x4, fixed_abs, tag = 'smem constant byte address 0x4 - core index']
  #allocation1 [shape = 'u32[144,128]{1,0:T(1,128)}', space=vmem, size = 0x12000, scoped, tag = 'internal scratch']
  %s0 = inlined_call_operand.hbm [shape: f32[2,2,4,162], index: 0, kind: input, shape index: {}]
  %s1 = inlined_call_operand.vmem [shape: f32[144], index: 1, kind: input, shape index: {}]
  %s2 = inlined_call_operand.vmem [shape: f32[1,4], index: 2, kind: input, shape index: {}]
  %s3 = inlined_call_operand.hbm [shape: f32[2,2,4,128], index: 3, kind: output, shape index: {}]
  %s4 = sld [smem:[#allocation0]]
  $region57: #{tpu_custom_call.1} parent=0
    _
  %s6 = ssub.s32 1, %s4
  %s7 = scalar_select 0, %s6, %s4
  $region1: #{tpu_custom_call.1} parent=0
    #allocation2 [shape = 'u8[8192]{0}', space=vmem, size = 0x2000, scoped, tag = 'input window, operand 0']
    #allocation3 [shape = 's32[2]{0}', space=sflag, size = 0x8, scoped, tag = 'scoped memory for tpu_custom_call.1']
    #allocation4 [shape = 's32[2]{0}', space=sflag, size = 0x8, scoped, tag = 'scoped memory for tpu_custom_call.1']
    #allocation5 [shape = 's32[2]{0}', space=sflag, size = 0x8, scoped, tag = 'scoped memory for tpu_custom_call.1']
    #allocation6 [shape = 'u8[1024]{0}', space=smem, size = 0x400, scoped, tag = 'input window, operand 1, single buffered']
    #allocation7 [shape = 'u8[512]{0}', space=smem, size = 0x200, scoped, tag = 'input window, operand 2, single buffered']
    #allocation8 [shape = 's32[1]{0}', space=sflag, size = 0x4, scoped, tag = 'scoped memory for tpu_custom_call.1']
    #allocation9 [shape = 'u8[4096]{0}', space=vmem, size = 0x1000, scoped, tag = 'output window, operand 0']
    %8 = vsyncpa [#allocation3], 0
    %s9 = scalar_lea.sflag [#allocation3], 1
    %10 = vsyncpa %s9, 0
    %11 = vsyncpa [#allocation5], 0
    %12 = vsyncpa [#allocation8], 0
    %13 = vsyncpa [#allocation4], 0
    %s14 = scalar_lea.sflag [#allocation4], 1
    %15 = vsyncpa %s14, 0
    loop: start=0, step=1, limit=6
    $region2: #{tpu_custom_call.1} parent=1 // loop_pre_header
      _
    $region3: #{tpu_custom_call.1} parent=1 // loop_header
      %s17 = sphi 0, %s21
      %p18 = scmp.ge.s32.totalorder %s17, 6
      %s24 = sphi 0, %s36
      %s25 = sphi 0, %s32
      %s26 = sphi 0, %s24
      %s27 = sphi 0, %s25
      %s28 = sphi 0, %s26
      %s29 = sphi 0, %s27
      %s41 = sphi 0, %s43
      %s44 = sphi 0, %s41
      %s45 = sphi 0, %s44
      %s61 = sphi 0, %s45
      %s65 = sphi 0, %s65
      %s67 = sphi 0, %s65
      %s68 = sphi 0, %s67
      %s82 = sphi 0, %s68
      %s86 = sphi 0, %s86
      %s88 = sphi 0, %s86
      %s89 = sphi 0, %s88
      %s103 = sphi 0, %s89
      %s111 = sphi 0, %s113
      %s114 = sphi 0, %s111
      %s115 = sphi 0, %s114
      %s131 = sphi 0, %s115
    $region4: #{tpu_custom_call.1} parent=1 // loop_header_branch
      %20 = sbr.rel (%p18) target = $region8
    $region5: #{tpu_custom_call.1} parent=1 // loop_body
      %s22 = ssub.s32 %s17, 1
      %s23 = ssub.s32 %s17, 2
      %s30 = sadd.s32 1, %s25
      %p31 = scmp.ge.s32.totalorder %s30, 2
      %s32 = scalar_select %p31, 0, %s30
      %s33 = sadd.s32 1, %s24
      %s34 = scalar_select %p31, %s33, %s24
      %p35 = scmp.ge.s32.totalorder %s34, 2
      %s36 = scalar_select %p35, 0, %s34
      %s37 = ssub.s32 %s24, %s36
      %s38 = ssub.s32 %s25, %s32
      %s39 = sor.u32 %s37, %s38
      %p40 = scmp.eq.s32.totalorder %s39, 0
      %s42 = sadd.s32 %s41, 1
      %s43 = scalar_select %p40, %s41, %s42
      %p46 = pneg %p40
      %p47 = scmp.eq.s32.totalorder %s17, 3
      %p48 = por %p46, %p47
      %p49 = scmp.ne.s32.totalorder %s41, %s44
      %p50 = scmp.eq.s32.totalorder %s17, 0
      %p51 = por %p49, %p50
      %p52 = scmp.ne.s32.totalorder %s41, %s44
      %p53 = scmp.eq.s32.totalorder %s22, 3
      %p54 = por %p52, %p53
      %p55 = scmp.ne.s32.totalorder %s44, %s45
      %p56 = scmp.eq.s32.totalorder %s22, 0
      %p57 = por %p55, %p56
      %p58 = scmp.ne.s32.totalorder %s44, %s45
      %p59 = scmp.eq.s32.totalorder %s23, 3
      %p60 = por %p58, %p59
      %p62 = scmp.ne.s32.totalorder %s45, %s61
      %p63 = scmp.eq.s32.totalorder %s23, 0
      %p64 = por %p62, %p63
      %s66 = sadd.s32 %s65, 1
      %p69 = scmp.eq.s32.totalorder %s17, 3
      %p70 = scmp.ne.s32.totalorder %s65, %s67
      %p71 = scmp.eq.s32.totalorder %s17, 0
      %p72 = por %p70, %p71
      %p73 = scmp.ne.s32.totalorder %s65, %s67
      %p74 = scmp.eq.s32.totalorder %s22, 3
      %p75 = por %p73, %p74
      %p76 = scmp.ne.s32.totalorder %s67, %s68
      %p77 = scmp.eq.s32.totalorder %s22, 0
      %p78 = por %p76, %p77
      %p79 = scmp.ne.s32.totalorder %s67, %s68
      %p80 = scmp.eq.s32.totalorder %s23, 3
      %p81 = por %p79, %p80
      %p83 = scmp.ne.s32.totalorder %s68, %s82
      %p84 = scmp.eq.s32.totalorder %s23, 0
      %p85 = por %p83, %p84
      %s87 = sadd.s32 %s86, 1
      %p90 = scmp.eq.s32.totalorder %s17, 3
      %p91 = scmp.ne.s32.totalorder %s86, %s88
      %p92 = scmp.eq.s32.totalorder %s17, 0
      %p93 = por %p91, %p92
      %p94 = scmp.ne.s32.totalorder %s86, %s88
      %p95 = scmp.eq.s32.totalorder %s22, 3
      %p96 = por %p94, %p95
      %p97 = scmp.ne.s32.totalorder %s88, %s89
      %p98 = scmp.eq.s32.totalorder %s22, 0
      %p99 = por %p97, %p98
      %p100 = scmp.ne.s32.totalorder %s88, %s89
      %p101 = scmp.eq.s32.totalorder %s23, 3
      %p102 = por %p100, %p101
      %p104 = scmp.ne.s32.totalorder %s89, %s103
      %p105 = scmp.eq.s32.totalorder %s23, 0
      %p106 = por %p104, %p105
      %s107 = ssub.s32 %s24, %s36
      %s108 = ssub.s32 %s25, %s32
      %s109 = sor.u32 %s107, %s108
      %p110 = scmp.eq.s32.totalorder %s109, 0
      %s112 = sadd.s32 %s111, 1
      %s113 = scalar_select %p110, %s111, %s112
      %p116 = pneg %p110
      %p117 = scmp.eq.s32.totalorder %s17, 3
      %p118 = por %p116, %p117
      %p119 = scmp.ne.s32.totalorder %s111, %s114
      %p120 = scmp.eq.s32.totalorder %s17, 0
      %p121 = por %p119, %p120
      %p122 = scmp.ne.s32.totalorder %s111, %s114
      %p123 = scmp.eq.s32.totalorder %s22, 3
      %p124 = por %p122, %p123
      %p125 = scmp.ne.s32.totalorder %s114, %s115
      %p126 = scmp.eq.s32.totalorder %s22, 0
      %p127 = por %p125, %p126
      %p128 = scmp.ne.s32.totalorder %s114, %s115
      %p129 = scmp.eq.s32.totalorder %s23, 3
      %p130 = por %p128, %p129
      %p132 = scmp.ne.s32.totalorder %s115, %s131
      %p133 = scmp.eq.s32.totalorder %s23, 0
      %p134 = por %p132, %p133
      %p135 = scmp.le.s32.totalorder 1, %s17
      %p136 = scmp.lt.s32.totalorder %s17, 5
      %p137 = pnand %p135, %p136
      %p138 = pneg %p137
      // Predicated region
      $region9: #{tpu_custom_call.1} parent=5 // pred_check
        _
      $region10: #{tpu_custom_call.1} parent=5 // pred_check_branch
        %140 = sbr.rel (%p137) target = $region12
      $region11: #{tpu_custom_call.1} parent=5 // pred_region
        %s141 = ssub.s32 %s17, 1
        // Predicated region
        $region13: #{tpu_custom_call.1} parent=11 // pred_check
          %p142 = pneg %p78
        $region14: #{tpu_custom_call.1} parent=11 // pred_check_branch
          %144 = sbr.rel (%p142) target = $region16
        $region15: #{tpu_custom_call.1} parent=11 // pred_region
          %s146 = ssub.s32 32, 32
          %147 = vsyncadd [#allocation5], %s146
          %s149 = sshll.u32 %s1, 4
          %s150 = int_to_ptr.vmem [resolvable:$true] %s149
          %152 = dma.vmem_to_smem %s150, 32, [#allocation6], [#allocation5]
        $region16: #{tpu_custom_call.1} parent=11 // pred_fallthru
          _
        // Predicated region
        $region17: #{tpu_custom_call.1} parent=11 // pred_check
          %p153 = pneg %p99
        $region18: #{tpu_custom_call.1} parent=11 // pred_check_branch
          %155 = sbr.rel (%p153) target = $region20
        $region19: #{tpu_custom_call.1} parent=11 // pred_region
          %s157 = ssub.s32 16, 16
          %158 = vsyncadd [#allocation8], %s157
          %s160 = sshll.u32 %s2, 4
          %s161 = int_to_ptr.vmem [resolvable:$true] %s160
          %163 = dma.vmem_to_smem %s161, 16, [#allocation7], [#allocation8]
        $region20: #{tpu_custom_call.1} parent=11 // pred_fallthru
          _
      $region12: #{tpu_custom_call.1} parent=5 // pred_fallthru
        _
      %p164 = scmp.lt.s32.totalorder %s17, 4
      // Predicated region
      $region21: #{tpu_custom_call.1} parent=5 // pred_check
        %p165 = pneg %p164
      $region22: #{tpu_custom_call.1} parent=5 // pred_check_branch
        %167 = sbr.rel (%p165) target = $region24
      $region23: #{tpu_custom_call.1} parent=5 // pred_region
        // Predicated region
        $region25: #{tpu_custom_call.1} parent=23 // pred_check
          %p168 = pneg %p51
        $region26: #{tpu_custom_call.1} parent=23 // pred_check_branch
          %170 = sbr.rel (%p168) target = $region28
        $region27: #{tpu_custom_call.1} parent=23 // pred_region
          %s171 = sand.u32 %s41, 1
          %s172 = scalar_lea.sflag [#allocation3], %s171
          %s173 = sand.u32 %s41, 1
          %s174 = smul.addr %s173, 8
          %s175 = scalar_lea.vmem [#allocation2], %s174
          %s177 = ssub.s32 128, 128
          %178 = vsyncadd %s172, %s177
          %s179 = smul.addr %s25, 2
          %s180 = smul.addr %s24, 4
          %s181 = sadd.s32 %s179, %s180
          %s182 = smul.addr %s181, 64
          %s183 = scalar_lea.hbm %s0, %s182
          %s185 = sshll.u32 %s175, 4
          %s186 = int_to_ptr.vmem [resolvable:$true] %s185
          %188 = dma.hbm_to_vmem [thread:$0]  %s183, 128, %s186, %s172
        $region28: #{tpu_custom_call.1} parent=23 // pred_fallthru
          _
      $region24: #{tpu_custom_call.1} parent=5 // pred_fallthru
        _
      %p189 = scmp.le.s32.totalorder 1, %s17
      %p190 = scmp.lt.s32.totalorder %s17, 5
      %p191 = pnand %p189, %p190
      %p192 = pneg %p191
      // Predicated region
      $region29: #{tpu_custom_call.1} parent=5 // pred_check
        _
      $region30: #{tpu_custom_call.1} parent=5 // pred_check_branch
        %194 = sbr.rel (%p191) target = $region32
      $region31: #{tpu_custom_call.1} parent=5 // pred_region
        %s195 = ssub.s32 %s17, 1
        %s196 = sand.u32 %s44, 1
        %s197 = scalar_lea.sflag [#allocation3], %s196
        %s198 = sand.u32 %s44, 1
        %s199 = smul.addr %s198, 8
        %s200 = scalar_lea.vmem [#allocation2], %s199
        // Predicated region
        $region33: #{tpu_custom_call.1} parent=31 // pred_check
          %p201 = pneg %p57
        $region34: #{tpu_custom_call.1} parent=31 // pred_check_branch
          %203 = sbr.rel (%p201) target = $region36
        $region35: #{tpu_custom_call.1} parent=31 // pred_region
          %204 = dma.done %s197, 128
        $region36: #{tpu_custom_call.1} parent=31 // pred_fallthru
          _
        // Predicated region
        $region37: #{tpu_custom_call.1} parent=31 // pred_check
          %p205 = pneg %p78
        $region38: #{tpu_custom_call.1} parent=31 // pred_check_branch
          %207 = sbr.rel (%p205) target = $region40
        $region39: #{tpu_custom_call.1} parent=31 // pred_region
          %208 = dma.done [#allocation5], 32
        $region40: #{tpu_custom_call.1} parent=31 // pred_fallthru
          _
        // Predicated region
        $region41: #{tpu_custom_call.1} parent=31 // pred_check
          %p209 = pneg %p99
        $region42: #{tpu_custom_call.1} parent=31 // pred_check_branch
          %211 = sbr.rel (%p209) target = $region44
        $region43: #{tpu_custom_call.1} parent=31 // pred_region
          %212 = dma.done [#allocation8], 16
        $region44: #{tpu_custom_call.1} parent=31 // pred_fallthru
          _
        %213 = sfence
        %s214 = sand.u32 %s44, 1
        %s215 = scalar_lea.sflag [#allocation3], %s214
        %s216 = sand.u32 %s44, 1
        %s217 = smul.addr %s216, 8
        %s218 = scalar_lea.vmem [#allocation2], %s217
        %p219 = pneg %p57
        %p220 = pneg %p54
        %p221 = pneg %p78
        %p222 = pneg %p75
        %p223 = pneg %p99
        %p224 = pneg %p96
        %p225 = pneg %p127
        %p226 = pneg %p124
        %s227 = sand.u32 %s114, 1
        %s228 = scalar_lea.sflag [#allocation4], %s227
        %s229 = sand.u32 %s114, 1
        %s230 = smul.addr %s229, 4
        %s231 = scalar_lea.vmem [#allocation9], %s230
        %v232 = vld [vmem:[%s200] sm:$0xff]
        %v233 = vlaneseq
        %v234 = vand.u32 %v233, 127
        %vm235 = vcmp.lt.s32.totalorder %v234, 0
        %v236 = vsub.s32 0, %v234
        %v237 = vsel %vm235, %v236, %v234
        %v238 = vshrl.u32 %v237, 4
        %v239 = vand.u32 %v237, 15
        %v240 = vsub.s32 0, %v239
        %v241 = vsel %vm235, %v240, %v239
        %vm242 = vcmp.ne.s32.totalorder %v241, 0
        %vm243 = vcmp.lt.s32.totalorder %v241, 0
        %vm244 = vmand %vm243, %vm242
        %v245 = vadd.s32 %v241, 16
        %v246 = vsel %vm244, %v245, %v241
        %vm247 = vcmp.gt.s32.totalorder %v246, 0
        %v248 = vsel %vm247, 1, 0
        %v249 = vcvt.s32.f32 %v248
        %vm250 = vcmp.lt.s32.totalorder %v246, 15
        %v251 = vsel %vm250, 1, 0
        %v252 = vcvt.s32.f32 %v251
        %s253 = sld [smem:[#allocation7]]
        %v254 = vstv %s253
        %v255 = vadd.f32 %v232, %v254
        %s256 = sld [smem:[#allocation7 + $0x1]]
        %v257 = vstv %s256
        %v258 = vadd.f32 %v232, %v257
        %s259 = sld [smem:[#allocation7 + $0x2]]
        %v260 = vstv %s259
        %v261 = vadd.f32 %v232, %v260
        %s262 = sld [smem:[#allocation7 + $0x3]]
        %v263 = vstv %s262
        %v264 = vadd.f32 %v232, %v263
        %v265 = vmul.f32 %v232, %v249
        %s266 = sld [smem:[#allocation6]]
        %v267 = vstv %s266
        %v268 = vmul.f32 %v267, %v265
        %270 = vrot.lane.b32.xlu0 %v268, 17
        %v271 = vpop.permute.xlu0 %270
        %v272 = vrot.slane %v271, 4
        %vm273 = vcmask 138240
        %v274 = vsel %vm273, %v272, %v271
        %v276 = vadd.f32 %v255, %v274
        %s277 = sld [smem:[#allocation6 + $0x1]]
        %v278 = vstv %s277
        %v279 = vmul.f32 %v278, %v265
        %v281 = vrot.slane %v279, 7
        %282 = vrot.lane.b32.xlu0 %v281, 17
        %v283 = vpop.permute.xlu0 %282
        %v284 = vrot.slane %v283, 4
        %v285 = vsel %vm273, %v284, %v283
        %v287 = vadd.f32 %v258, %v285
        %s288 = sld [smem:[#allocation6 + $0x2]]
        %v289 = vstv %s288
        %v290 = vmul.f32 %v289, %v265
        %v292 = vrot.slane %v290, 6
        %293 = vrot.lane.b32.xlu0 %v292, 17
        %v294 = vpop.permute.xlu0 %293
        %v295 = vrot.slane %v294, 4
        %v296 = vsel %vm273, %v295, %v294
        %v298 = vadd.f32 %v261, %v296
        %s299 = sld [smem:[#allocation6 + $0x3]]
        %v300 = vstv %s299
        %v301 = vmul.f32 %v300, %v265
        %v303 = vrot.slane %v301, 5
        %304 = vrot.lane.b32.xlu0 %v303, 17
        %v305 = vpop.permute.xlu0 %304
        %v306 = vrot.slane %v305, 4
        %v307 = vsel %vm273, %v306, %v305
        %v309 = vadd.f32 %v264, %v307
        %s310 = sld [smem:[#allocation6 + $0x10]]
        %v311 = vstv %s310
        %v312 = vmul.f32 %v311, %v232
        %314 = vrot.lane.b32.xlu0 %v312, 16
        %v315 = vpop.permute.xlu0 %314
        %v316 = vrot.slane %v315, 4
        %vm317 = vcmask 130048
        %v318 = vsel %vm317, %v316, %v315
        %v320 = vadd.f32 %v276, %v318
        %s321 = sld [smem:[#allocation6 + $0x11]]
        %v322 = vstv %s321
        %v323 = vmul.f32 %v322, %v232
        %v325 = vrot.slane %v323, 7
        %326 = vrot.lane.b32.xlu0 %v325, 16
        %v327 = vpop.permute.xlu0 %326
        %v328 = vrot.slane %v327, 4
        %v329 = vsel %vm317, %v328, %v327
        %v331 = vadd.f32 %v287, %v329
        %s332 = sld [smem:[#allocation6 + $0x12]]
        %v333 = vstv %s332
        %v334 = vmul.f32 %v333, %v232
        %v336 = vrot.slane %v334, 6
        %337 = vrot.lane.b32.xlu0 %v336, 16
        %v338 = vpop.permute.xlu0 %337
        %v339 = vrot.slane %v338, 4
        %v340 = vsel %vm317, %v339, %v338
        %v342 = vadd.f32 %v298, %v340
        %s343 = sld [smem:[#allocation6 + $0x13]]
        %v344 = vstv %s343
        %v345 = vmul.f32 %v344, %v232
        %v347 = vrot.slane %v345, 5
        %348 = vrot.lane.b32.xlu0 %v347, 16
        %v349 = vpop.permute.xlu0 %348
        %v350 = vrot.slane %v349, 4
        %v351 = vsel %vm317, %v350, %v349
        %v353 = vadd.f32 %v309, %v351
        %355 = vrot.lane.b32.xlu0 %v252, 2
        %v356 = vpop.permute.xlu0 %355
        %v357 = vrot.slane %v356, 4
        %vm358 = vcmask 15360
        %v359 = vsel %vm358, %v357, %v356
        %v361 = vmul.f32 %v232, %v359
        %s362 = sld [smem:[#allocation6 + $0x20]]
        %v363 = vstv %s362
        %v364 = vmul.f32 %v363, %v361
        %366 = vrot.lane.b32.xlu0 %v364, 15
        %v367 = vpop.permute.xlu0 %366
        %v368 = vrot.slane %v367, 4
        %vm369 = vcmask 121856
        %v370 = vsel %vm369, %v368, %v367
        %v372 = vadd.f32 %v320, %v370
        %s373 = sld [smem:[#allocation6 + $0x21]]
        %v374 = vstv %s373
        %v375 = vmul.f32 %v374, %v361
        %v377 = vrot.slane %v375, 7
        %378 = vrot.lane.b32.xlu0 %v377, 15
        %v379 = vpop.permute.xlu0 %378
        %v380 = vrot.slane %v379, 4
        %v381 = vsel %vm369, %v380, %v379
        %v383 = vadd.f32 %v331, %v381
        %s384 = sld [smem:[#allocation6 + $0x22]]
        %v385 = vstv %s384
        %v386 = vmul.f32 %v385, %v361
        %v388 = vrot.slane %v386, 6
        %389 = vrot.lane.b32.xlu0 %v388, 15
        %v390 = vpop.permute.xlu0 %389
        %v391 = vrot.slane %v390, 4
        %v392 = vsel %vm369, %v391, %v390
        %v394 = vadd.f32 %v342, %v392
        %s395 = sld [smem:[#allocation6 + $0x23]]
        %v396 = vstv %s395
        %v397 = vmul.f32 %v396, %v361
        %v399 = vrot.slane %v397, 5
        %400 = vrot.lane.b32.xlu0 %v399, 15
        %v401 = vpop.permute.xlu0 %400
        %v402 = vrot.slane %v401, 4
        %v403 = vsel %vm369, %v402, %v401
        %v405 = vadd.f32 %v353, %v403
        %407 = vrot.lane.b32.xlu0 %v249, 16
        %v408 = vpop.permute.xlu0 %407
        %v409 = vrot.slane %v408, 4
        %v410 = vsel %vm317, %v409, %v408
        %v412 = vmul.f32 %v232, %v410
        %s413 = sld [smem:[#allocation6 + $0x30]]
        %v414 = vstv %s413
        %v415 = vmul.f32 %v414, %v412
        %417 = vrot.lane.b32.xlu0 %v415, 1
        %v418 = vpop.permute.xlu0 %417
        %v419 = vrot.slane %v418, 4
        %vm420 = vcmask 7168
        %v421 = vsel %vm420, %v419, %v418
        %v423 = vadd.f32 %v372, %v421
        %s424 = sld [smem:[#allocation6 + $0x31]]
        %v425 = vstv %s424
        %v426 = vmul.f32 %v425, %v412
        %v428 = vrot.slane %v426, 7
        %429 = vrot.lane.b32.xlu0 %v428, 1
        %v430 = vpop.permute.xlu0 %429
        %v431 = vrot.slane %v430, 4
        %v432 = vsel %vm420, %v431, %v430
        %v434 = vadd.f32 %v383, %v432
        %s435 = sld [smem:[#allocation6 + $0x32]]
        %v436 = vstv %s435
        %v437 = vmul.f32 %v436, %v412
        %v439 = vrot.slane %v437, 6
        %440 = vrot.lane.b32.xlu0 %v439, 1
        %v441 = vpop.permute.xlu0 %440
        %v442 = vrot.slane %v441, 4
        %v443 = vsel %vm420, %v442, %v441
        %v445 = vadd.f32 %v394, %v443
        %s446 = sld [smem:[#allocation6 + $0x33]]
        %v447 = vstv %s446
        %v448 = vmul.f32 %v447, %v412
        %v450 = vrot.slane %v448, 5
        %451 = vrot.lane.b32.xlu0 %v450, 1
        %v452 = vpop.permute.xlu0 %451
        %v453 = vrot.slane %v452, 4
        %v454 = vsel %vm420, %v453, %v452
        %v456 = vadd.f32 %v405, %v454
        %s457 = sld [smem:[#allocation6 + $0x40]]
        %v458 = vstv %s457
        %v459 = vmul.f32 %v458, %v232
        %v460 = vadd.f32 %v423, %v459
        %s461 = sld [smem:[#allocation6 + $0x41]]
        %v462 = vstv %s461
        %v463 = vmul.f32 %v462, %v232
        %v465 = vrot.slane %v463, 7
        %v467 = vadd.f32 %v434, %v465
        %s468 = sld [smem:[#allocation6 + $0x42]]
        %v469 = vstv %s468
        %v470 = vmul.f32 %v469, %v232
        %v472 = vrot.slane %v470, 6
        %v474 = vadd.f32 %v445, %v472
        %s475 = sld [smem:[#allocation6 + $0x43]]
        %v476 = vstv %s475
        %v477 = vmul.f32 %v476, %v232
        %v479 = vrot.slane %v477, 5
        %v481 = vadd.f32 %v456, %v479
        %482 = vrot.lane.b32.xlu0 %v252, 18
        %v483 = vpop.permute.xlu0 %482
        %v484 = vrot.slane %v483, 4
        %vm485 = vcmask 146432
        %v486 = vsel %vm485, %v484, %v483
        %v488 = vmul.f32 %v232, %v486
        %s489 = sld [smem:[#allocation6 + $0x50]]
        %v490 = vstv %s489
        %v491 = vmul.f32 %v490, %v488
        %493 = vrot.lane.b32.xlu0 %v491, 127
        %v494 = vpop.permute.xlu0 %493
        %v495 = vrot.slane %v494, 4
        %vm496 = vcmask 1039360
        %v497 = vsel %vm496, %v494, %v495
        %v499 = vadd.f32 %v460, %v497
        %s500 = sld [smem:[#allocation6 + $0x51]]
        %v501 = vstv %s500
        %v502 = vmul.f32 %v501, %v488
        %v504 = vrot.slane %v502, 7
        %505 = vrot.lane.b32.xlu0 %v504, 127
        %v506 = vpop.permute.xlu0 %505
        %v507 = vrot.slane %v506, 4
        %v508 = vsel %vm496, %v506, %v507
        %v510 = vadd.f32 %v467, %v508
        %s511 = sld [smem:[#allocation6 + $0x52]]
        %v512 = vstv %s511
        %v513 = vmul.f32 %v512, %v488
        %v515 = vrot.slane %v513, 6
        %516 = vrot.lane.b32.xlu0 %v515, 127
        %v517 = vpop.permute.xlu0 %516
        %v518 = vrot.slane %v517, 4
        %v519 = vsel %vm496, %v517, %v518
        %v521 = vadd.f32 %v474, %v519
        %s522 = sld [smem:[#allocation6 + $0x53]]
        %v523 = vstv %s522
        %v524 = vmul.f32 %v523, %v488
        %v526 = vrot.slane %v524, 5
        %527 = vrot.lane.b32.xlu0 %v526, 127
        %v528 = vpop.permute.xlu0 %527
        %v529 = vrot.slane %v528, 4
        %v530 = vsel %vm496, %v528, %v529
        %v532 = vadd.f32 %v481, %v530
        %533 = vrot.lane.b32.xlu0 %v249, 32
        %v534 = vpop.permute.xlu0 %533
        %v535 = vrot.slane %v534, 4
        %vm536 = vcmask 261120
        %v537 = vsel %vm536, %v535, %v534
        %v539 = vmul.f32 %v232, %v537
        %s540 = sld [smem:[#allocation6 + $0x60]]
        %v541 = vstv %s540
        %v542 = vmul.f32 %v541, %v539
        %544 = vrot.lane.b32.xlu0 %v542, 113
        %v545 = vpop.permute.xlu0 %544
        %v546 = vrot.slane %v545, 4
        %vm547 = vcmask 924672
        %v548 = vsel %vm547, %v545, %v546
        %v550 = vadd.f32 %v499, %v548
        %s551 = sld [smem:[#allocation6 + $0x61]]
        %v552 = vstv %s551
        %v553 = vmul.f32 %v552, %v539
        %v555 = vrot.slane %v553, 7
        %556 = vrot.lane.b32.xlu0 %v555, 113
        %v557 = vpop.permute.xlu0 %556
        %v558 = vrot.slane %v557, 4
        %v559 = vsel %vm547, %v557, %v558
        %v561 = vadd.f32 %v510, %v559
        %s562 = sld [smem:[#allocation6 + $0x62]]
        %v563 = vstv %s562
        %v564 = vmul.f32 %v563, %v539
        %v566 = vrot.slane %v564, 6
        %567 = vrot.lane.b32.xlu0 %v566, 113
        %v568 = vpop.permute.xlu0 %567
        %v569 = vrot.slane %v568, 4
        %v570 = vsel %vm547, %v568, %v569
        %v572 = vadd.f32 %v521, %v570
        %s573 = sld [smem:[#allocation6 + $0x63]]
        %v574 = vstv %s573
        %v575 = vmul.f32 %v574, %v539
        %v577 = vrot.slane %v575, 5
        %578 = vrot.lane.b32.xlu0 %v577, 113
        %v579 = vpop.permute.xlu0 %578
        %v580 = vrot.slane %v579, 4
        %v581 = vsel %vm547, %v579, %v580
        %v583 = vadd.f32 %v532, %v581
        %s584 = sld [smem:[#allocation6 + $0x70]]
        %v585 = vstv %s584
        %v586 = vmul.f32 %v585, %v232
        %588 = vrot.lane.b32.xlu0 %v586, 112
        %v589 = vpop.permute.xlu0 %588
        %v590 = vrot.slane %v589, 4
        %vm591 = vcmask 916480
        %v592 = vsel %vm591, %v589, %v590
        %v594 = vadd.f32 %v550, %v592
        %s595 = sld [smem:[#allocation6 + $0x71]]
        %v596 = vstv %s595
        %v597 = vmul.f32 %v596, %v232
        %v599 = vrot.slane %v597, 7
        %600 = vrot.lane.b32.xlu0 %v599, 112
        %v601 = vpop.permute.xlu0 %600
        %v602 = vrot.slane %v601, 4
        %v603 = vsel %vm591, %v601, %v602
        %v605 = vadd.f32 %v561, %v603
        %s606 = sld [smem:[#allocation6 + $0x72]]
        %v607 = vstv %s606
        %v608 = vmul.f32 %v607, %v232
        %v610 = vrot.slane %v608, 6
        %611 = vrot.lane.b32.xlu0 %v610, 112
        %v612 = vpop.permute.xlu0 %611
        %v613 = vrot.slane %v612, 4
        %v614 = vsel %vm591, %v612, %v613
        %v616 = vadd.f32 %v572, %v614
        %s617 = sld [smem:[#allocation6 + $0x73]]
        %v618 = vstv %s617
        %v619 = vmul.f32 %v618, %v232
        %v621 = vrot.slane %v619, 5
        %622 = vrot.lane.b32.xlu0 %v621, 112
        %v623 = vpop.permute.xlu0 %622
        %v624 = vrot.slane %v623, 4
        %v625 = vsel %vm591, %v623, %v624
        %v627 = vadd.f32 %v583, %v625
        %628 = vrot.lane.b32.xlu0 %v252, 34
        %v629 = vpop.permute.xlu0 %628
        %v630 = vrot.slane %v629, 4
        %vm631 = vcmask 277504
        %v632 = vsel %vm631, %v630, %v629
        %v634 = vmul.f32 %v232, %v632
        %s635 = sld [smem:[#allocation6 + $0x80]]
        %v636 = vstv %s635
        %v637 = vmul.f32 %v636, %v634
        %639 = vrot.lane.b32.xlu0 %v637, 111
        %v640 = vpop.permute.xlu0 %639
        %v641 = vrot.slane %v640, 4
        %vm642 = vcmask 908288
        %v643 = vsel %vm642, %v640, %v641
        %v645 = vadd.f32 %v594, %v643
        %s646 = sld [smem:[#allocation6 + $0x81]]
        %v647 = vstv %s646
        %v648 = vmul.f32 %v647, %v634
        %v650 = vrot.slane %v648, 7
        %651 = vrot.lane.b32.xlu0 %v650, 111
        %v652 = vpop.permute.xlu0 %651
        %v653 = vrot.slane %v652, 4
        %v654 = vsel %vm642, %v652, %v653
        %v656 = vadd.f32 %v605, %v654
        %s657 = sld [smem:[#allocation6 + $0x82]]
        %v658 = vstv %s657
        %v659 = vmul.f32 %v658, %v634
        %v661 = vrot.slane %v659, 6
        %662 = vrot.lane.b32.xlu0 %v661, 111
        %v663 = vpop.permute.xlu0 %662
        %v664 = vrot.slane %v663, 4
        %v665 = vsel %vm642, %v663, %v664
        %v667 = vadd.f32 %v616, %v665
        %s668 = sld [smem:[#allocation6 + $0x83]]
        %v669 = vstv %s668
        %v670 = vmul.f32 %v669, %v634
        %v672 = vrot.slane %v670, 5
        %673 = vrot.lane.b32.xlu0 %v672, 111
        %v674 = vpop.permute.xlu0 %673
        %v675 = vrot.slane %v674, 4
        %v676 = vsel %vm642, %v674, %v675
        %v678 = vadd.f32 %v627, %v676
        %s679 = sld [smem:[#allocation6 + $0x4]]
        %v680 = vstv %s679
        %v681 = vmul.f32 %v680, %v265
        %v683 = vrot.slane %v681, 5
        %v684 = vrot.slane %v683, 4
        %685 = vrot.lane.b32.xlu0 %v684, 17
        %v686 = vpop.permute.xlu0 %685
        %v687 = vrot.slane %v686, 4
        %v688 = vsel %vm273, %v687, %v686
        %v690 = vadd.f32 %v645, %v688
        %s691 = sld [smem:[#allocation6 + $0x5]]
        %v692 = vstv %s691
        %v693 = vmul.f32 %v692, %v265
        %695 = vrot.lane.b32.xlu0 %v693, 17
        %v696 = vpop.permute.xlu0 %695
        %v697 = vrot.slane %v696, 4
        %v698 = vsel %vm273, %v697, %v696
        %v700 = vadd.f32 %v656, %v698
        %s701 = sld [smem:[#allocation6 + $0x6]]
        %v702 = vstv %s701
        %v703 = vmul.f32 %v702, %v265
        %v705 = vrot.slane %v703, 7
        %706 = vrot.lane.b32.xlu0 %v705, 17
        %v707 = vpop.permute.xlu0 %706
        %v708 = vrot.slane %v707, 4
        %v709 = vsel %vm273, %v708, %v707
        %v711 = vadd.f32 %v667, %v709
        %s712 = sld [smem:[#allocation6 + $0x7]]
        %v713 = vstv %s712
        %v714 = vmul.f32 %v713, %v265
        %v716 = vrot.slane %v714, 6
        %717 = vrot.lane.b32.xlu0 %v716, 17
        %v718 = vpop.permute.xlu0 %717
        %v719 = vrot.slane %v718, 4
        %v720 = vsel %vm273, %v719, %v718
        %v722 = vadd.f32 %v678, %v720
        %s723 = sld [smem:[#allocation6 + $0x14]]
        %v724 = vstv %s723
        %v725 = vmul.f32 %v724, %v232
        %v727 = vrot.slane %v725, 5
        %v728 = vrot.slane %v727, 4
        %729 = vrot.lane.b32.xlu0 %v728, 16
        %v730 = vpop.permute.xlu0 %729
        %v731 = vrot.slane %v730, 4
        %v732 = vsel %vm317, %v731, %v730
        %v734 = vadd.f32 %v690, %v732
        %s735 = sld [smem:[#allocation6 + $0x15]]
        %v736 = vstv %s735
        %v737 = vmul.f32 %v736, %v232
        %739 = vrot.lane.b32.xlu0 %v737, 16
        %v740 = vpop.permute.xlu0 %739
        %v741 = vrot.slane %v740, 4
        %v742 = vsel %vm317, %v741, %v740
        %v744 = vadd.f32 %v700, %v742
        %s745 = sld [smem:[#allocation6 + $0x16]]
        %v746 = vstv %s745
        %v747 = vmul.f32 %v746, %v232
        %v749 = vrot.slane %v747, 7
        %750 = vrot.lane.b32.xlu0 %v749, 16
        %v751 = vpop.permute.xlu0 %750
        %v752 = vrot.slane %v751, 4
        %v753 = vsel %vm317, %v752, %v751
        %v755 = vadd.f32 %v711, %v753
        %s756 = sld [smem:[#allocation6 + $0x17]]
        %v757 = vstv %s756
        %v758 = vmul.f32 %v757, %v232
        %v760 = vrot.slane %v758, 6
        %761 = vrot.lane.b32.xlu0 %v760, 16
        %v762 = vpop.permute.xlu0 %761
        %v763 = vrot.slane %v762, 4
        %v764 = vsel %vm317, %v763, %v762
        %v766 = vadd.f32 %v722, %v764
        %v767 = vrot.slane %v252, 7
        %768 = vrot.lane.b32.xlu0 %v767, 2
        %v769 = vpop.permute.xlu0 %768
        %v770 = vrot.slane %v769, 4
        %v771 = vsel %vm358, %v770, %v769
        %v773 = vmul.f32 %v232, %v771
        %s774 = sld [smem:[#allocation6 + $0x24]]
        %v775 = vstv %s774
        %v776 = vmul.f32 %v775, %v773
        %v778 = vrot.slane %v776, 5
        %v779 = vrot.slane %v778, 4
        %780 = vrot.lane.b32.xlu0 %v779, 15
        %v781 = vpop.permute.xlu0 %780
        %v782 = vrot.slane %v781, 4
        %v783 = vsel %vm369, %v782, %v781
        %v785 = vadd.f32 %v734, %v783
        %s786 = sld [smem:[#allocation6 + $0x25]]
        %v787 = vstv %s786
        %v788 = vmul.f32 %v787, %v773
        %790 = vrot.lane.b32.xlu0 %v788, 15
        %v791 = vpop.permute.xlu0 %790
        %v792 = vrot.slane %v791, 4
        %v793 = vsel %vm369, %v792, %v791
        %v795 = vadd.f32 %v744, %v793
        %s796 = sld [smem:[#allocation6 + $0x26]]
        %v797 = vstv %s796
        %v798 = vmul.f32 %v797, %v773
        %v800 = vrot.slane %v798, 7
        %801 = vrot.lane.b32.xlu0 %v800, 15
        %v802 = vpop.permute.xlu0 %801
        %v803 = vrot.slane %v802, 4
        %v804 = vsel %vm369, %v803, %v802
        %v806 = vadd.f32 %v755, %v804
        %s807 = sld [smem:[#allocation6 + $0x27]]
        %v808 = vstv %s807
        %v809 = vmul.f32 %v808, %v773
        %v811 = vrot.slane %v809, 6
        %812 = vrot.lane.b32.xlu0 %v811, 15
        %v813 = vpop.permute.xlu0 %812
        %v814 = vrot.slane %v813, 4
        %v815 = vsel %vm369, %v814, %v813
        %v817 = vadd.f32 %v766, %v815
        %v818 = vrot.slane %v249, 7
        %819 = vrot.lane.b32.xlu0 %v818, 16
        %v820 = vpop.permute.xlu0 %819
        %v821 = vrot.slane %v820, 4
        %v822 = vsel %vm317, %v821, %v820
        %v824 = vmul.f32 %v232, %v822
        %s825 = sld [smem:[#allocation6 + $0x34]]
        %v826 = vstv %s825
        %v827 = vmul.f32 %v826, %v824
        %v829 = vrot.slane %v827, 5
        %v830 = vrot.slane %v829, 4
        %831 = vrot.lane.b32.xlu0 %v830, 1
        %v832 = vpop.permute.xlu0 %831
        %v833 = vrot.slane %v832, 4
        %v834 = vsel %vm420, %v833, %v832
        %v836 = vadd.f32 %v785, %v834
        %s837 = sld [smem:[#allocation6 + $0x35]]
        %v838 = vstv %s837
        %v839 = vmul.f32 %v838, %v824
        %841 = vrot.lane.b32.xlu0 %v839, 1
        %v842 = vpop.permute.xlu0 %841
        %v843 = vrot.slane %v842, 4
        %v844 = vsel %vm420, %v843, %v842
        %v846 = vadd.f32 %v795, %v844
        %s847 = sld [smem:[#allocation6 + $0x36]]
        %v848 = vstv %s847
        %v849 = vmul.f32 %v848, %v824
        %v851 = vrot.slane %v849, 7
        %852 = vrot.lane.b32.xlu0 %v851, 1
        %v853 = vpop.permute.xlu0 %852
        %v854 = vrot.slane %v853, 4
        %v855 = vsel %vm420, %v854, %v853
        %v857 = vadd.f32 %v806, %v855
        %s858 = sld [smem:[#allocation6 + $0x37]]
        %v859 = vstv %s858
        %v860 = vmul.f32 %v859, %v824
        %v862 = vrot.slane %v860, 6
        %863 = vrot.lane.b32.xlu0 %v862, 1
        %v864 = vpop.permute.xlu0 %863
        %v865 = vrot.slane %v864, 4
        %v866 = vsel %vm420, %v865, %v864
        %v868 = vadd.f32 %v817, %v866
        %s869 = sld [smem:[#allocation6 + $0x44]]
        %v870 = vstv %s869
        %v871 = vmul.f32 %v870, %v232
        %v873 = vrot.slane %v871, 5
        %v874 = vrot.slane %v873, 4
        %v876 = vadd.f32 %v836, %v874
        %s877 = sld [smem:[#allocation6 + $0x45]]
        %v878 = vstv %s877
        %v879 = vmul.f32 %v878, %v232
        %v880 = vadd.f32 %v846, %v879
        %s881 = sld [smem:[#allocation6 + $0x46]]
        %v882 = vstv %s881
        %v883 = vmul.f32 %v882, %v232
        %v885 = vrot.slane %v883, 7
        %v887 = vadd.f32 %v857, %v885
        %s888 = sld [smem:[#allocation6 + $0x47]]
        %v889 = vstv %s888
        %v890 = vmul.f32 %v889, %v232
        %v892 = vrot.slane %v890, 6
        %v894 = vadd.f32 %v868, %v892
        %895 = vrot.lane.b32.xlu0 %v767, 18
        %v896 = vpop.permute.xlu0 %895
        %v897 = vrot.slane %v896, 4
        %v898 = vsel %vm485, %v897, %v896
        %v900 = vmul.f32 %v232, %v898
        %s901 = sld [smem:[#allocation6 + $0x54]]
        %v902 = vstv %s901
        %v903 = vmul.f32 %v902, %v900
        %v905 = vrot.slane %v903, 5
        %v906 = vrot.slane %v905, 4
        %907 = vrot.lane.b32.xlu0 %v906, 127
        %v908 = vpop.permute.xlu0 %907
        %v909 = vrot.slane %v908, 4
        %v910 = vsel %vm496, %v908, %v909
        %v912 = vadd.f32 %v876, %v910
        %s913 = sld [smem:[#allocation6 + $0x55]]
        %v914 = vstv %s913
        %v915 = vmul.f32 %v914, %v900
        %917 = vrot.lane.b32.xlu0 %v915, 127
        %v918 = vpop.permute.xlu0 %917
        %v919 = vrot.slane %v918, 4
        %v920 = vsel %vm496, %v918, %v919
        %v922 = vadd.f32 %v880, %v920
        %s923 = sld [smem:[#allocation6 + $0x56]]
        %v924 = vstv %s923
        %v925 = vmul.f32 %v924, %v900
        %v927 = vrot.slane %v925, 7
        %928 = vrot.lane.b32.xlu0 %v927, 127
        %v929 = vpop.permute.xlu0 %928
        %v930 = vrot.slane %v929, 4
        %v931 = vsel %vm496, %v929, %v930
        %v933 = vadd.f32 %v887, %v931
        %s934 = sld [smem:[#allocation6 + $0x57]]
        %v935 = vstv %s934
        %v936 = vmul.f32 %v935, %v900
        %v938 = vrot.slane %v936, 6
        %939 = vrot.lane.b32.xlu0 %v938, 127
        %v940 = vpop.permute.xlu0 %939
        %v941 = vrot.slane %v940, 4
        %v942 = vsel %vm496, %v940, %v941
        %v944 = vadd.f32 %v894, %v942
        %945 = vrot.lane.b32.xlu0 %v818, 32
        %v946 = vpop.permute.xlu0 %945
        %v947 = vrot.slane %v946, 4
        %v948 = vsel %vm536, %v947, %v946
        %v950 = vmul.f32 %v232, %v948
        %s951 = sld [smem:[#allocation6 + $0x64]]
        %v952 = vstv %s951
        %v953 = vmul.f32 %v952, %v950
        %v955 = vrot.slane %v953, 5
        %v956 = vrot.slane %v955, 4
        %957 = vrot.lane.b32.xlu0 %v956, 113
        %v958 = vpop.permute.xlu0 %957
        %v959 = vrot.slane %v958, 4
        %v960 = vsel %vm547, %v958, %v959
        %v962 = vadd.f32 %v912, %v960
        %s963 = sld [smem:[#allocation6 + $0x65]]
        %v964 = vstv %s963
        %v965 = vmul.f32 %v964, %v950
        %967 = vrot.lane.b32.xlu0 %v965, 113
        %v968 = vpop.permute.xlu0 %967
        %v969 = vrot.slane %v968, 4
        %v970 = vsel %vm547, %v968, %v969
        %v972 = vadd.f32 %v922, %v970
        %s973 = sld [smem:[#allocation6 + $0x66]]
        %v974 = vstv %s973
        %v975 = vmul.f32 %v974, %v950
        %v977 = vrot.slane %v975, 7
        %978 = vrot.lane.b32.xlu0 %v977, 113
        %v979 = vpop.permute.xlu0 %978
        %v980 = vrot.slane %v979, 4
        %v981 = vsel %vm547, %v979, %v980
        %v983 = vadd.f32 %v933, %v981
        %s984 = sld [smem:[#allocation6 + $0x67]]
        %v985 = vstv %s984
        %v986 = vmul.f32 %v985, %v950
        %v988 = vrot.slane %v986, 6
        %989 = vrot.lane.b32.xlu0 %v988, 113
        %v990 = vpop.permute.xlu0 %989
        %v991 = vrot.slane %v990, 4
        %v992 = vsel %vm547, %v990, %v991
        %v994 = vadd.f32 %v944, %v992
        %s995 = sld [smem:[#allocation6 + $0x74]]
        %v996 = vstv %s995
        %v997 = vmul.f32 %v996, %v232
        %v999 = vrot.slane %v997, 5
        %v1000 = vrot.slane %v999, 4
        %1001 = vrot.lane.b32.xlu0 %v1000, 112
        %v1002 = vpop.permute.xlu0 %1001
        %v1003 = vrot.slane %v1002, 4
        %v1004 = vsel %vm591, %v1002, %v1003
        %v1006 = vadd.f32 %v962, %v1004
        %s1007 = sld [smem:[#allocation6 + $0x75]]
        %v1008 = vstv %s1007
        %v1009 = vmul.f32 %v1008, %v232
        %1011 = vrot.lane.b32.xlu0 %v1009, 112
        %v1012 = vpop.permute.xlu0 %1011
        %v1013 = vrot.slane %v1012, 4
        %v1014 = vsel %vm591, %v1012, %v1013
        %v1016 = vadd.f32 %v972, %v1014
        %s1017 = sld [smem:[#allocation6 + $0x76]]
        %v1018 = vstv %s1017
        %v1019 = vmul.f32 %v1018, %v232
        %v1021 = vrot.slane %v1019, 7
        %1022 = vrot.lane.b32.xlu0 %v1021, 112
        %v1023 = vpop.permute.xlu0 %1022
        %v1024 = vrot.slane %v1023, 4
        %v1025 = vsel %vm591, %v1023, %v1024
        %v1027 = vadd.f32 %v983, %v1025
        %s1028 = sld [smem:[#allocation6 + $0x77]]
        %v1029 = vstv %s1028
        %v1030 = vmul.f32 %v1029, %v232
        %v1032 = vrot.slane %v1030, 6
        %1033 = vrot.lane.b32.xlu0 %v1032, 112
        %v1034 = vpop.permute.xlu0 %1033
        %v1035 = vrot.slane %v1034, 4
        %v1036 = vsel %vm591, %v1034, %v1035
        %v1038 = vadd.f32 %v994, %v1036
        %1039 = vrot.lane.b32.xlu0 %v767, 34
        %v1040 = vpop.permute.xlu0 %1039
        %v1041 = vrot.slane %v1040, 4
        %v1042 = vsel %vm631, %v1041, %v1040
        %v1044 = vmul.f32 %v232, %v1042
        %s1045 = sld [smem:[#allocation6 + $0x84]]
        %v1046 = vstv %s1045
        %v1047 = vmul.f32 %v1046, %v1044
        %v1049 = vrot.slane %v1047, 5
        %v1050 = vrot.slane %v1049, 4
        %1051 = vrot.lane.b32.xlu0 %v1050, 111
        %v1052 = vpop.permute.xlu0 %1051
        %v1053 = vrot.slane %v1052, 4
        %v1054 = vsel %vm642, %v1052, %v1053
        %v1056 = vadd.f32 %v1006, %v1054
        %s1057 = sld [smem:[#allocation6 + $0x85]]
        %v1058 = vstv %s1057
        %v1059 = vmul.f32 %v1058, %v1044
        %1061 = vrot.lane.b32.xlu0 %v1059, 111
        %v1062 = vpop.permute.xlu0 %1061
        %v1063 = vrot.slane %v1062, 4
        %v1064 = vsel %vm642, %v1062, %v1063
        %v1066 = vadd.f32 %v1016, %v1064
        %s1067 = sld [smem:[#allocation6 + $0x86]]
        %v1068 = vstv %s1067
        %v1069 = vmul.f32 %v1068, %v1044
        %v1071 = vrot.slane %v1069, 7
        %1072 = vrot.lane.b32.xlu0 %v1071, 111
        %v1073 = vpop.permute.xlu0 %1072
        %v1074 = vrot.slane %v1073, 4
        %v1075 = vsel %vm642, %v1073, %v1074
        %v1077 = vadd.f32 %v1027, %v1075
        %s1078 = sld [smem:[#allocation6 + $0x87]]
        %v1079 = vstv %s1078
        %v1080 = vmul.f32 %v1079, %v1044
        %v1082 = vrot.slane %v1080, 6
        %1083 = vrot.lane.b32.xlu0 %v1082, 111
        %v1084 = vpop.permute.xlu0 %1083
        %v1085 = vrot.slane %v1084, 4
        %v1086 = vsel %vm642, %v1084, %v1085
        %v1088 = vadd.f32 %v1038, %v1086
        %s1089 = sld [smem:[#allocation6 + $0x8]]
        %v1090 = vstv %s1089
        %v1091 = vmul.f32 %v1090, %v265
        %v1093 = vrot.slane %v1091, 6
        %v1094 = vrot.slane %v1093, 4
        %1095 = vrot.lane.b32.xlu0 %v1094, 17
        %v1096 = vpop.permute.xlu0 %1095
        %v1097 = vrot.slane %v1096, 4
        %v1098 = vsel %vm273, %v1097, %v1096
        %v1100 = vadd.f32 %v1056, %v1098
        %s1101 = sld [smem:[#allocation6 + $0x9]]
        %v1102 = vstv %s1101
        %v1103 = vmul.f32 %v1102, %v265
        %v1105 = vrot.slane %v1103, 5
        %v1106 = vrot.slane %v1105, 4
        %1107 = vrot.lane.b32.xlu0 %v1106, 17
        %v1108 = vpop.permute.xlu0 %1107
        %v1109 = vrot.slane %v1108, 4
        %v1110 = vsel %vm273, %v1109, %v1108
        %v1112 = vadd.f32 %v1066, %v1110
        %s1113 = sld [smem:[#allocation6 + $0xa]]
        %v1114 = vstv %s1113
        %v1115 = vmul.f32 %v1114, %v265
        %1117 = vrot.lane.b32.xlu0 %v1115, 17
        %v1118 = vpop.permute.xlu0 %1117
        %v1119 = vrot.slane %v1118, 4
        %v1120 = vsel %vm273, %v1119, %v1118
        %v1122 = vadd.f32 %v1077, %v1120
        %s1123 = sld [smem:[#allocation6 + $0xb]]
        %v1124 = vstv %s1123
        %v1125 = vmul.f32 %v1124, %v265
        %v1127 = vrot.slane %v1125, 7
        %1128 = vrot.lane.b32.xlu0 %v1127, 17
        %v1129 = vpop.permute.xlu0 %1128
        %v1130 = vrot.slane %v1129, 4
        %v1131 = vsel %vm273, %v1130, %v1129
        %v1133 = vadd.f32 %v1088, %v1131
        %s1134 = sld [smem:[#allocation6 + $0x18]]
        %v1135 = vstv %s1134
        %v1136 = vmul.f32 %v1135, %v232
        %v1138 = vrot.slane %v1136, 6
        %v1139 = vrot.slane %v1138, 4
        %1140 = vrot.lane.b32.xlu0 %v1139, 16
        %v1141 = vpop.permute.xlu0 %1140
        %v1142 = vrot.slane %v1141, 4
        %v1143 = vsel %vm317, %v1142, %v1141
        %v1145 = vadd.f32 %v1100, %v1143
        %s1146 = sld [smem:[#allocation6 + $0x19]]
        %v1147 = vstv %s1146
        %v1148 = vmul.f32 %v1147, %v232
        %v1150 = vrot.slane %v1148, 5
        %v1151 = vrot.slane %v1150, 4
        %1152 = vrot.lane.b32.xlu0 %v1151, 16
        %v1153 = vpop.permute.xlu0 %1152
        %v1154 = vrot.slane %v1153, 4
        %v1155 = vsel %vm317, %v1154, %v1153
        %v1157 = vadd.f32 %v1112, %v1155
        %s1158 = sld [smem:[#allocation6 + $0x1a]]
        %v1159 = vstv %s1158
        %v1160 = vmul.f32 %v1159, %v232
        %1162 = vrot.lane.b32.xlu0 %v1160, 16
        %v1163 = vpop.permute.xlu0 %1162
        %v1164 = vrot.slane %v1163, 4
        %v1165 = vsel %vm317, %v1164, %v1163
        %v1167 = vadd.f32 %v1122, %v1165
        %s1168 = sld [smem:[#allocation6 + $0x1b]]
        %v1169 = vstv %s1168
        %v1170 = vmul.f32 %v1169, %v232
        %v1172 = vrot.slane %v1170, 7
        %1173 = vrot.lane.b32.xlu0 %v1172, 16
        %v1174 = vpop.permute.xlu0 %1173
        %v1175 = vrot.slane %v1174, 4
        %v1176 = vsel %vm317, %v1175, %v1174
        %v1178 = vadd.f32 %v1133, %v1176
        %v1179 = vrot.slane %v252, 6
        %1180 = vrot.lane.b32.xlu0 %v1179, 2
        %v1181 = vpop.permute.xlu0 %1180
        %v1182 = vrot.slane %v1181, 4
        %v1183 = vsel %vm358, %v1182, %v1181
        %v1185 = vmul.f32 %v232, %v1183
        %s1186 = sld [smem:[#allocation6 + $0x28]]
        %v1187 = vstv %s1186
        %v1188 = vmul.f32 %v1187, %v1185
        %v1190 = vrot.slane %v1188, 6
        %v1191 = vrot.slane %v1190, 4
        %1192 = vrot.lane.b32.xlu0 %v1191, 15
        %v1193 = vpop.permute.xlu0 %1192
        %v1194 = vrot.slane %v1193, 4
        %v1195 = vsel %vm369, %v1194, %v1193
        %v1197 = vadd.f32 %v1145, %v1195
        %s1198 = sld [smem:[#allocation6 + $0x29]]
        %v1199 = vstv %s1198
        %v1200 = vmul.f32 %v1199, %v1185
        %v1202 = vrot.slane %v1200, 5
        %v1203 = vrot.slane %v1202, 4
        %1204 = vrot.lane.b32.xlu0 %v1203, 15
        %v1205 = vpop.permute.xlu0 %1204
        %v1206 = vrot.slane %v1205, 4
        %v1207 = vsel %vm369, %v1206, %v1205
        %v1209 = vadd.f32 %v1157, %v1207
        %s1210 = sld [smem:[#allocation6 + $0x2a]]
        %v1211 = vstv %s1210
        %v1212 = vmul.f32 %v1211, %v1185
        %1214 = vrot.lane.b32.xlu0 %v1212, 15
        %v1215 = vpop.permute.xlu0 %1214
        %v1216 = vrot.slane %v1215, 4
        %v1217 = vsel %vm369, %v1216, %v1215
        %v1219 = vadd.f32 %v1167, %v1217
        %s1220 = sld [smem:[#allocation6 + $0x2b]]
        %v1221 = vstv %s1220
        %v1222 = vmul.f32 %v1221, %v1185
        %v1224 = vrot.slane %v1222, 7
        %1225 = vrot.lane.b32.xlu0 %v1224, 15
        %v1226 = vpop.permute.xlu0 %1225
        %v1227 = vrot.slane %v1226, 4
        %v1228 = vsel %vm369, %v1227, %v1226
        %v1230 = vadd.f32 %v1178, %v1228
        %v1231 = vrot.slane %v249, 6
        %1232 = vrot.lane.b32.xlu0 %v1231, 16
        %v1233 = vpop.permute.xlu0 %1232
        %v1234 = vrot.slane %v1233, 4
        %v1235 = vsel %vm317, %v1234, %v1233
        %v1237 = vmul.f32 %v232, %v1235
        %s1238 = sld [smem:[#allocation6 + $0x38]]
        %v1239 = vstv %s1238
        %v1240 = vmul.f32 %v1239, %v1237
        %v1242 = vrot.slane %v1240, 6
        %v1243 = vrot.slane %v1242, 4
        %1244 = vrot.lane.b32.xlu0 %v1243, 1
        %v1245 = vpop.permute.xlu0 %1244
        %v1246 = vrot.slane %v1245, 4
        %v1247 = vsel %vm420, %v1246, %v1245
        %v1249 = vadd.f32 %v1197, %v1247
        %s1250 = sld [smem:[#allocation6 + $0x39]]
        %v1251 = vstv %s1250
        %v1252 = vmul.f32 %v1251, %v1237
        %v1254 = vrot.slane %v1252, 5
        %v1255 = vrot.slane %v1254, 4
        %1256 = vrot.lane.b32.xlu0 %v1255, 1
        %v1257 = vpop.permute.xlu0 %1256
        %v1258 = vrot.slane %v1257, 4
        %v1259 = vsel %vm420, %v1258, %v1257
        %v1261 = vadd.f32 %v1209, %v1259
        %s1262 = sld [smem:[#allocation6 + $0x3a]]
        %v1263 = vstv %s1262
        %v1264 = vmul.f32 %v1263, %v1237
        %1266 = vrot.lane.b32.xlu0 %v1264, 1
        %v1267 = vpop.permute.xlu0 %1266
        %v1268 = vrot.slane %v1267, 4
        %v1269 = vsel %vm420, %v1268, %v1267
        %v1271 = vadd.f32 %v1219, %v1269
        %s1272 = sld [smem:[#allocation6 + $0x3b]]
        %v1273 = vstv %s1272
        %v1274 = vmul.f32 %v1273, %v1237
        %v1276 = vrot.slane %v1274, 7
        %1277 = vrot.lane.b32.xlu0 %v1276, 1
        %v1278 = vpop.permute.xlu0 %1277
        %v1279 = vrot.slane %v1278, 4
        %v1280 = vsel %vm420, %v1279, %v1278
        %v1282 = vadd.f32 %v1230, %v1280
        %s1283 = sld [smem:[#allocation6 + $0x48]]
        %v1284 = vstv %s1283
        %v1285 = vmul.f32 %v1284, %v232
        %v1287 = vrot.slane %v1285, 6
        %v1288 = vrot.slane %v1287, 4
        %v1290 = vadd.f32 %v1249, %v1288
        %s1291 = sld [smem:[#allocation6 + $0x49]]
        %v1292 = vstv %s1291
        %v1293 = vmul.f32 %v1292, %v232
        %v1295 = vrot.slane %v1293, 5
        %v1296 = vrot.slane %v1295, 4
        %v1298 = vadd.f32 %v1261, %v1296
        %s1299 = sld [smem:[#allocation6 + $0x4a]]
        %v1300 = vstv %s1299
        %v1301 = vmul.f32 %v1300, %v232
        %v1302 = vadd.f32 %v1271, %v1301
        %s1303 = sld [smem:[#allocation6 + $0x4b]]
        %v1304 = vstv %s1303
        %v1305 = vmul.f32 %v1304, %v232
        %v1307 = vrot.slane %v1305, 7
        %v1309 = vadd.f32 %v1282, %v1307
        %1310 = vrot.lane.b32.xlu0 %v1179, 18
        %v1311 = vpop.permute.xlu0 %1310
        %v1312 = vrot.slane %v1311, 4
        %v1313 = vsel %vm485, %v1312, %v1311
        %v1315 = vmul.f32 %v232, %v1313
        %s1316 = sld [smem:[#allocation6 + $0x58]]
        %v1317 = vstv %s1316
        %v1318 = vmul.f32 %v1317, %v1315
        %v1320 = vrot.slane %v1318, 6
        %v1321 = vrot.slane %v1320, 4
        %1322 = vrot.lane.b32.xlu0 %v1321, 127
        %v1323 = vpop.permute.xlu0 %1322
        %v1324 = vrot.slane %v1323, 4
        %v1325 = vsel %vm496, %v1323, %v1324
        %v1327 = vadd.f32 %v1290, %v1325
        %s1328 = sld [smem:[#allocation6 + $0x59]]
        %v1329 = vstv %s1328
        %v1330 = vmul.f32 %v1329, %v1315
        %v1332 = vrot.slane %v1330, 5
        %v1333 = vrot.slane %v1332, 4
        %1334 = vrot.lane.b32.xlu0 %v1333, 127
        %v1335 = vpop.permute.xlu0 %1334
        %v1336 = vrot.slane %v1335, 4
        %v1337 = vsel %vm496, %v1335, %v1336
        %v1339 = vadd.f32 %v1298, %v1337
        %s1340 = sld [smem:[#allocation6 + $0x5a]]
        %v1341 = vstv %s1340
        %v1342 = vmul.f32 %v1341, %v1315
        %1344 = vrot.lane.b32.xlu0 %v1342, 127
        %v1345 = vpop.permute.xlu0 %1344
        %v1346 = vrot.slane %v1345, 4
        %v1347 = vsel %vm496, %v1345, %v1346
        %v1349 = vadd.f32 %v1302, %v1347
        %s1350 = sld [smem:[#allocation6 + $0x5b]]
        %v1351 = vstv %s1350
        %v1352 = vmul.f32 %v1351, %v1315
        %v1354 = vrot.slane %v1352, 7
        %1355 = vrot.lane.b32.xlu0 %v1354, 127
        %v1356 = vpop.permute.xlu0 %1355
        %v1357 = vrot.slane %v1356, 4
        %v1358 = vsel %vm496, %v1356, %v1357
        %v1360 = vadd.f32 %v1309, %v1358
        %1361 = vrot.lane.b32.xlu0 %v1231, 32
        %v1362 = vpop.permute.xlu0 %1361
        %v1363 = vrot.slane %v1362, 4
        %v1364 = vsel %vm536, %v1363, %v1362
        %v1366 = vmul.f32 %v232, %v1364
        %s1367 = sld [smem:[#allocation6 + $0x68]]
        %v1368 = vstv %s1367
        %v1369 = vmul.f32 %v1368, %v1366
        %v1371 = vrot.slane %v1369, 6
        %v1372 = vrot.slane %v1371, 4
        %1373 = vrot.lane.b32.xlu0 %v1372, 113
        %v1374 = vpop.permute.xlu0 %1373
        %v1375 = vrot.slane %v1374, 4
        %v1376 = vsel %vm547, %v1374, %v1375
        %v1378 = vadd.f32 %v1327, %v1376
        %s1379 = sld [smem:[#allocation6 + $0x69]]
        %v1380 = vstv %s1379
        %v1381 = vmul.f32 %v1380, %v1366
        %v1383 = vrot.slane %v1381, 5
        %v1384 = vrot.slane %v1383, 4
        %1385 = vrot.lane.b32.xlu0 %v1384, 113
        %v1386 = vpop.permute.xlu0 %1385
        %v1387 = vrot.slane %v1386, 4
        %v1388 = vsel %vm547, %v1386, %v1387
        %v1390 = vadd.f32 %v1339, %v1388
        %s1391 = sld [smem:[#allocation6 + $0x6a]]
        %v1392 = vstv %s1391
        %v1393 = vmul.f32 %v1392, %v1366
        %1395 = vrot.lane.b32.xlu0 %v1393, 113
        %v1396 = vpop.permute.xlu0 %1395
        %v1397 = vrot.slane %v1396, 4
        %v1398 = vsel %vm547, %v1396, %v1397
        %v1400 = vadd.f32 %v1349, %v1398
        %s1401 = sld [smem:[#allocation6 + $0x6b]]
        %v1402 = vstv %s1401
        %v1403 = vmul.f32 %v1402, %v1366
        %v1405 = vrot.slane %v1403, 7
        %1406 = vrot.lane.b32.xlu0 %v1405, 113
        %v1407 = vpop.permute.xlu0 %1406
        %v1408 = vrot.slane %v1407, 4
        %v1409 = vsel %vm547, %v1407, %v1408
        %v1411 = vadd.f32 %v1360, %v1409
        %s1412 = sld [smem:[#allocation6 + $0x78]]
        %v1413 = vstv %s1412
        %v1414 = vmul.f32 %v1413, %v232
        %v1416 = vrot.slane %v1414, 6
        %v1417 = vrot.slane %v1416, 4
        %1418 = vrot.lane.b32.xlu0 %v1417, 112
        %v1419 = vpop.permute.xlu0 %1418
        %v1420 = vrot.slane %v1419, 4
        %v1421 = vsel %vm591, %v1419, %v1420
        %v1423 = vadd.f32 %v1378, %v1421
        %s1424 = sld [smem:[#allocation6 + $0x79]]
        %v1425 = vstv %s1424
        %v1426 = vmul.f32 %v1425, %v232
        %v1428 = vrot.slane %v1426, 5
        %v1429 = vrot.slane %v1428, 4
        %1430 = vrot.lane.b32.xlu0 %v1429, 112
        %v1431 = vpop.permute.xlu0 %1430
        %v1432 = vrot.slane %v1431, 4
        %v1433 = vsel %vm591, %v1431, %v1432
        %v1435 = vadd.f32 %v1390, %v1433
        %s1436 = sld [smem:[#allocation6 + $0x7a]]
        %v1437 = vstv %s1436
        %v1438 = vmul.f32 %v1437, %v232
        %1440 = vrot.lane.b32.xlu0 %v1438, 112
        %v1441 = vpop.permute.xlu0 %1440
        %v1442 = vrot.slane %v1441, 4
        %v1443 = vsel %vm591, %v1441, %v1442
        %v1445 = vadd.f32 %v1400, %v1443
        %s1446 = sld [smem:[#allocation6 + $0x7b]]
        %v1447 = vstv %s1446
        %v1448 = vmul.f32 %v1447, %v232
        %v1450 = vrot.slane %v1448, 7
        %1451 = vrot.lane.b32.xlu0 %v1450, 112
        %v1452 = vpop.permute.xlu0 %1451
        %v1453 = vrot.slane %v1452, 4
        %v1454 = vsel %vm591, %v1452, %v1453
        %v1456 = vadd.f32 %v1411, %v1454
        %1457 = vrot.lane.b32.xlu0 %v1179, 34
        %v1458 = vpop.permute.xlu0 %1457
        %v1459 = vrot.slane %v1458, 4
        %v1460 = vsel %vm631, %v1459, %v1458
        %v1462 = vmul.f32 %v232, %v1460
        %s1463 = sld [smem:[#allocation6 + $0x88]]
        %v1464 = vstv %s1463
        %v1465 = vmul.f32 %v1464, %v1462
        %v1467 = vrot.slane %v1465, 6
        %v1468 = vrot.slane %v1467, 4
        %1469 = vrot.lane.b32.xlu0 %v1468, 111
        %v1470 = vpop.permute.xlu0 %1469
        %v1471 = vrot.slane %v1470, 4
        %v1472 = vsel %vm642, %v1470, %v1471
        %v1474 = vadd.f32 %v1423, %v1472
        %s1475 = sld [smem:[#allocation6 + $0x89]]
        %v1476 = vstv %s1475
        %v1477 = vmul.f32 %v1476, %v1462
        %v1479 = vrot.slane %v1477, 5
        %v1480 = vrot.slane %v1479, 4
        %1481 = vrot.lane.b32.xlu0 %v1480, 111
        %v1482 = vpop.permute.xlu0 %1481
        %v1483 = vrot.slane %v1482, 4
        %v1484 = vsel %vm642, %v1482, %v1483
        %v1486 = vadd.f32 %v1435, %v1484
        %s1487 = sld [smem:[#allocation6 + $0x8a]]
        %v1488 = vstv %s1487
        %v1489 = vmul.f32 %v1488, %v1462
        %1491 = vrot.lane.b32.xlu0 %v1489, 111
        %v1492 = vpop.permute.xlu0 %1491
        %v1493 = vrot.slane %v1492, 4
        %v1494 = vsel %vm642, %v1492, %v1493
        %v1496 = vadd.f32 %v1445, %v1494
        %s1497 = sld [smem:[#allocation6 + $0x8b]]
        %v1498 = vstv %s1497
        %v1499 = vmul.f32 %v1498, %v1462
        %v1501 = vrot.slane %v1499, 7
        %1502 = vrot.lane.b32.xlu0 %v1501, 111
        %v1503 = vpop.permute.xlu0 %1502
        %v1504 = vrot.slane %v1503, 4
        %v1505 = vsel %vm642, %v1503, %v1504
        %v1507 = vadd.f32 %v1456, %v1505
        %s1508 = sld [smem:[#allocation6 + $0xc]]
        %v1509 = vstv %s1508
        %v1510 = vmul.f32 %v1509, %v265
        %v1512 = vrot.slane %v1510, 7
        %v1513 = vrot.slane %v1512, 4
        %1514 = vrot.lane.b32.xlu0 %v1513, 17
        %v1515 = vpop.permute.xlu0 %1514
        %v1516 = vrot.slane %v1515, 4
        %v1517 = vsel %vm273, %v1516, %v1515
        %v1519 = vadd.f32 %v1474, %v1517
        %s1520 = sld [smem:[#allocation6 + $0xd]]
        %v1521 = vstv %s1520
        %v1522 = vmul.f32 %v1521, %v265
        %v1524 = vrot.slane %v1522, 6
        %v1525 = vrot.slane %v1524, 4
        %1526 = vrot.lane.b32.xlu0 %v1525, 17
        %v1527 = vpop.permute.xlu0 %1526
        %v1528 = vrot.slane %v1527, 4
        %v1529 = vsel %vm273, %v1528, %v1527
        %v1531 = vadd.f32 %v1486, %v1529
        %s1532 = sld [smem:[#allocation6 + $0xe]]
        %v1533 = vstv %s1532
        %v1534 = vmul.f32 %v1533, %v265
        %v1536 = vrot.slane %v1534, 5
        %v1537 = vrot.slane %v1536, 4
        %1538 = vrot.lane.b32.xlu0 %v1537, 17
        %v1539 = vpop.permute.xlu0 %1538
        %v1540 = vrot.slane %v1539, 4
        %v1541 = vsel %vm273, %v1540, %v1539
        %v1543 = vadd.f32 %v1496, %v1541
        %s1544 = sld [smem:[#allocation6 + $0xf]]
        %v1545 = vstv %s1544
        %v1546 = vmul.f32 %v1545, %v265
        %1548 = vrot.lane.b32.xlu0 %v1546, 17
        %v1549 = vpop.permute.xlu0 %1548
        %v1550 = vrot.slane %v1549, 4
        %v1551 = vsel %vm273, %v1550, %v1549
        %v1553 = vadd.f32 %v1507, %v1551
        %s1554 = sld [smem:[#allocation6 + $0x1c]]
        %v1555 = vstv %s1554
        %v1556 = vmul.f32 %v1555, %v232
        %v1558 = vrot.slane %v1556, 7
        %v1559 = vrot.slane %v1558, 4
        %1560 = vrot.lane.b32.xlu0 %v1559, 16
        %v1561 = vpop.permute.xlu0 %1560
        %v1562 = vrot.slane %v1561, 4
        %v1563 = vsel %vm317, %v1562, %v1561
        %v1565 = vadd.f32 %v1519, %v1563
        %s1566 = sld [smem:[#allocation6 + $0x1d]]
        %v1567 = vstv %s1566
        %v1568 = vmul.f32 %v1567, %v232
        %v1570 = vrot.slane %v1568, 6
        %v1571 = vrot.slane %v1570, 4
        %1572 = vrot.lane.b32.xlu0 %v1571, 16
        %v1573 = vpop.permute.xlu0 %1572
        %v1574 = vrot.slane %v1573, 4
        %v1575 = vsel %vm317, %v1574, %v1573
        %v1577 = vadd.f32 %v1531, %v1575
        %s1578 = sld [smem:[#allocation6 + $0x1e]]
        %v1579 = vstv %s1578
        %v1580 = vmul.f32 %v1579, %v232
        %v1582 = vrot.slane %v1580, 5
        %v1583 = vrot.slane %v1582, 4
        %1584 = vrot.lane.b32.xlu0 %v1583, 16
        %v1585 = vpop.permute.xlu0 %1584
        %v1586 = vrot.slane %v1585, 4
        %v1587 = vsel %vm317, %v1586, %v1585
        %v1589 = vadd.f32 %v1543, %v1587
        %s1590 = sld [smem:[#allocation6 + $0x1f]]
        %v1591 = vstv %s1590
        %v1592 = vmul.f32 %v1591, %v232
        %1594 = vrot.lane.b32.xlu0 %v1592, 16
        %v1595 = vpop.permute.xlu0 %1594
        %v1596 = vrot.slane %v1595, 4
        %v1597 = vsel %vm317, %v1596, %v1595
        %v1599 = vadd.f32 %v1553, %v1597
        %v1600 = vrot.slane %v252, 5
        %1601 = vrot.lane.b32.xlu0 %v1600, 2
        %v1602 = vpop.permute.xlu0 %1601
        %v1603 = vrot.slane %v1602, 4
        %v1604 = vsel %vm358, %v1603, %v1602
        %v1606 = vmul.f32 %v232, %v1604
        %s1607 = sld [smem:[#allocation6 + $0x2c]]
        %v1608 = vstv %s1607
        %v1609 = vmul.f32 %v1608, %v1606
        %v1611 = vrot.slane %v1609, 7
        %v1612 = vrot.slane %v1611, 4
        %1613 = vrot.lane.b32.xlu0 %v1612, 15
        %v1614 = vpop.permute.xlu0 %1613
        %v1615 = vrot.slane %v1614, 4
        %v1616 = vsel %vm369, %v1615, %v1614
        %v1618 = vadd.f32 %v1565, %v1616
        %s1619 = sld [smem:[#allocation6 + $0x2d]]
        %v1620 = vstv %s1619
        %v1621 = vmul.f32 %v1620, %v1606
        %v1623 = vrot.slane %v1621, 6
        %v1624 = vrot.slane %v1623, 4
        %1625 = vrot.lane.b32.xlu0 %v1624, 15
        %v1626 = vpop.permute.xlu0 %1625
        %v1627 = vrot.slane %v1626, 4
        %v1628 = vsel %vm369, %v1627, %v1626
        %v1630 = vadd.f32 %v1577, %v1628
        %s1631 = sld [smem:[#allocation6 + $0x2e]]
        %v1632 = vstv %s1631
        %v1633 = vmul.f32 %v1632, %v1606
        %v1635 = vrot.slane %v1633, 5
        %v1636 = vrot.slane %v1635, 4
        %1637 = vrot.lane.b32.xlu0 %v1636, 15
        %v1638 = vpop.permute.xlu0 %1637
        %v1639 = vrot.slane %v1638, 4
        %v1640 = vsel %vm369, %v1639, %v1638
        %v1642 = vadd.f32 %v1589, %v1640
        %s1643 = sld [smem:[#allocation6 + $0x2f]]
        %v1644 = vstv %s1643
        %v1645 = vmul.f32 %v1644, %v1606
        %1647 = vrot.lane.b32.xlu0 %v1645, 15
        %v1648 = vpop.permute.xlu0 %1647
        %v1649 = vrot.slane %v1648, 4
        %v1650 = vsel %vm369, %v1649, %v1648
        %v1652 = vadd.f32 %v1599, %v1650
        %v1653 = vrot.slane %v249, 5
        %1654 = vrot.lane.b32.xlu0 %v1653, 16
        %v1655 = vpop.permute.xlu0 %1654
        %v1656 = vrot.slane %v1655, 4
        %v1657 = vsel %vm317, %v1656, %v1655
        %v1659 = vmul.f32 %v232, %v1657
        %s1660 = sld [smem:[#allocation6 + $0x3c]]
        %v1661 = vstv %s1660
        %v1662 = vmul.f32 %v1661, %v1659
        %v1664 = vrot.slane %v1662, 7
        %v1665 = vrot.slane %v1664, 4
        %1666 = vrot.lane.b32.xlu0 %v1665, 1
        %v1667 = vpop.permute.xlu0 %1666
        %v1668 = vrot.slane %v1667, 4
        %v1669 = vsel %vm420, %v1668, %v1667
        %v1671 = vadd.f32 %v1618, %v1669
        %s1672 = sld [smem:[#allocation6 + $0x3d]]
        %v1673 = vstv %s1672
        %v1674 = vmul.f32 %v1673, %v1659
        %v1676 = vrot.slane %v1674, 6
        %v1677 = vrot.slane %v1676, 4
        %1678 = vrot.lane.b32.xlu0 %v1677, 1
        %v1679 = vpop.permute.xlu0 %1678
        %v1680 = vrot.slane %v1679, 4
        %v1681 = vsel %vm420, %v1680, %v1679
        %v1683 = vadd.f32 %v1630, %v1681
        %s1684 = sld [smem:[#allocation6 + $0x3e]]
        %v1685 = vstv %s1684
        %v1686 = vmul.f32 %v1685, %v1659
        %v1688 = vrot.slane %v1686, 5
        %v1689 = vrot.slane %v1688, 4
        %1690 = vrot.lane.b32.xlu0 %v1689, 1
        %v1691 = vpop.permute.xlu0 %1690
        %v1692 = vrot.slane %v1691, 4
        %v1693 = vsel %vm420, %v1692, %v1691
        %v1695 = vadd.f32 %v1642, %v1693
        %s1696 = sld [smem:[#allocation6 + $0x3f]]
        %v1697 = vstv %s1696
        %v1698 = vmul.f32 %v1697, %v1659
        %1700 = vrot.lane.b32.xlu0 %v1698, 1
        %v1701 = vpop.permute.xlu0 %1700
        %v1702 = vrot.slane %v1701, 4
        %v1703 = vsel %vm420, %v1702, %v1701
        %v1705 = vadd.f32 %v1652, %v1703
        %s1706 = sld [smem:[#allocation6 + $0x4c]]
        %v1707 = vstv %s1706
        %v1708 = vmul.f32 %v1707, %v232
        %v1710 = vrot.slane %v1708, 7
        %v1711 = vrot.slane %v1710, 4
        %v1713 = vadd.f32 %v1671, %v1711
        %s1714 = sld [smem:[#allocation6 + $0x4d]]
        %v1715 = vstv %s1714
        %v1716 = vmul.f32 %v1715, %v232
        %v1718 = vrot.slane %v1716, 6
        %v1719 = vrot.slane %v1718, 4
        %v1721 = vadd.f32 %v1683, %v1719
        %s1722 = sld [smem:[#allocation6 + $0x4e]]
        %v1723 = vstv %s1722
        %v1724 = vmul.f32 %v1723, %v232
        %v1726 = vrot.slane %v1724, 5
        %v1727 = vrot.slane %v1726, 4
        %v1729 = vadd.f32 %v1695, %v1727
        %s1730 = sld [smem:[#allocation6 + $0x4f]]
        %v1731 = vstv %s1730
        %v1732 = vmul.f32 %v1731, %v232
        %v1733 = vadd.f32 %v1705, %v1732
        %1734 = vrot.lane.b32.xlu0 %v1600, 18
        %v1735 = vpop.permute.xlu0 %1734
        %v1736 = vrot.slane %v1735, 4
        %v1737 = vsel %vm485, %v1736, %v1735
        %v1739 = vmul.f32 %v232, %v1737
        %s1740 = sld [smem:[#allocation6 + $0x5c]]
        %v1741 = vstv %s1740
        %v1742 = vmul.f32 %v1741, %v1739
        %v1744 = vrot.slane %v1742, 7
        %v1745 = vrot.slane %v1744, 4
        %1746 = vrot.lane.b32.xlu0 %v1745, 127
        %v1747 = vpop.permute.xlu0 %1746
        %v1748 = vrot.slane %v1747, 4
        %v1749 = vsel %vm496, %v1747, %v1748
        %v1751 = vadd.f32 %v1713, %v1749
        %s1752 = sld [smem:[#allocation6 + $0x5d]]
        %v1753 = vstv %s1752
        %v1754 = vmul.f32 %v1753, %v1739
        %v1756 = vrot.slane %v1754, 6
        %v1757 = vrot.slane %v1756, 4
        %1758 = vrot.lane.b32.xlu0 %v1757, 127
        %v1759 = vpop.permute.xlu0 %1758
        %v1760 = vrot.slane %v1759, 4
        %v1761 = vsel %vm496, %v1759, %v1760
        %v1763 = vadd.f32 %v1721, %v1761
        %s1764 = sld [smem:[#allocation6 + $0x5e]]
        %v1765 = vstv %s1764
        %v1766 = vmul.f32 %v1765, %v1739
        %v1768 = vrot.slane %v1766, 5
        %v1769 = vrot.slane %v1768, 4
        %1770 = vrot.lane.b32.xlu0 %v1769, 127
        %v1771 = vpop.permute.xlu0 %1770
        %v1772 = vrot.slane %v1771, 4
        %v1773 = vsel %vm496, %v1771, %v1772
        %v1775 = vadd.f32 %v1729, %v1773
        %s1776 = sld [smem:[#allocation6 + $0x5f]]
        %v1777 = vstv %s1776
        %v1778 = vmul.f32 %v1777, %v1739
        %1780 = vrot.lane.b32.xlu0 %v1778, 127
        %v1781 = vpop.permute.xlu0 %1780
        %v1782 = vrot.slane %v1781, 4
        %v1783 = vsel %vm496, %v1781, %v1782
        %v1785 = vadd.f32 %v1733, %v1783
        %1786 = vrot.lane.b32.xlu0 %v1653, 32
        %v1787 = vpop.permute.xlu0 %1786
        %v1788 = vrot.slane %v1787, 4
        %v1789 = vsel %vm536, %v1788, %v1787
        %v1791 = vmul.f32 %v232, %v1789
        %s1792 = sld [smem:[#allocation6 + $0x6c]]
        %v1793 = vstv %s1792
        %v1794 = vmul.f32 %v1793, %v1791
        %v1796 = vrot.slane %v1794, 7
        %v1797 = vrot.slane %v1796, 4
        %1798 = vrot.lane.b32.xlu0 %v1797, 113
        %v1799 = vpop.permute.xlu0 %1798
        %v1800 = vrot.slane %v1799, 4
        %v1801 = vsel %vm547, %v1799, %v1800
        %v1803 = vadd.f32 %v1751, %v1801
        %s1804 = sld [smem:[#allocation6 + $0x6d]]
        %v1805 = vstv %s1804
        %v1806 = vmul.f32 %v1805, %v1791
        %v1808 = vrot.slane %v1806, 6
        %v1809 = vrot.slane %v1808, 4
        %1810 = vrot.lane.b32.xlu0 %v1809, 113
        %v1811 = vpop.permute.xlu0 %1810
        %v1812 = vrot.slane %v1811, 4
        %v1813 = vsel %vm547, %v1811, %v1812
        %v1815 = vadd.f32 %v1763, %v1813
        %s1816 = sld [smem:[#allocation6 + $0x6e]]
        %v1817 = vstv %s1816
        %v1818 = vmul.f32 %v1817, %v1791
        %v1820 = vrot.slane %v1818, 5
        %v1821 = vrot.slane %v1820, 4
        %1822 = vrot.lane.b32.xlu0 %v1821, 113
        %v1823 = vpop.permute.xlu0 %1822
        %v1824 = vrot.slane %v1823, 4
        %v1825 = vsel %vm547, %v1823, %v1824
        %v1827 = vadd.f32 %v1775, %v1825
        %s1828 = sld [smem:[#allocation6 + $0x6f]]
        %v1829 = vstv %s1828
        %v1830 = vmul.f32 %v1829, %v1791
        %1832 = vrot.lane.b32.xlu0 %v1830, 113
        %v1833 = vpop.permute.xlu0 %1832
        %v1834 = vrot.slane %v1833, 4
        %v1835 = vsel %vm547, %v1833, %v1834
        %v1837 = vadd.f32 %v1785, %v1835
        %s1838 = sld [smem:[#allocation6 + $0x7c]]
        %v1839 = vstv %s1838
        %v1840 = vmul.f32 %v1839, %v232
        %v1842 = vrot.slane %v1840, 7
        %v1843 = vrot.slane %v1842, 4
        %1844 = vrot.lane.b32.xlu0 %v1843, 112
        %v1845 = vpop.permute.xlu0 %1844
        %v1846 = vrot.slane %v1845, 4
        %v1847 = vsel %vm591, %v1845, %v1846
        %v1849 = vadd.f32 %v1803, %v1847
        %s1850 = sld [smem:[#allocation6 + $0x7d]]
        %v1851 = vstv %s1850
        %v1852 = vmul.f32 %v1851, %v232
        %v1854 = vrot.slane %v1852, 6
        %v1855 = vrot.slane %v1854, 4
        %1856 = vrot.lane.b32.xlu0 %v1855, 112
        %v1857 = vpop.permute.xlu0 %1856
        %v1858 = vrot.slane %v1857, 4
        %v1859 = vsel %vm591, %v1857, %v1858
        %v1861 = vadd.f32 %v1815, %v1859
        %s1862 = sld [smem:[#allocation6 + $0x7e]]
        %v1863 = vstv %s1862
        %v1864 = vmul.f32 %v1863, %v232
        %v1866 = vrot.slane %v1864, 5
        %v1867 = vrot.slane %v1866, 4
        %1868 = vrot.lane.b32.xlu0 %v1867, 112
        %v1869 = vpop.permute.xlu0 %1868
        %v1870 = vrot.slane %v1869, 4
        %v1871 = vsel %vm591, %v1869, %v1870
        %v1873 = vadd.f32 %v1827, %v1871
        %s1874 = sld [smem:[#allocation6 + $0x7f]]
        %v1875 = vstv %s1874
        %v1876 = vmul.f32 %v1875, %v232
        %1878 = vrot.lane.b32.xlu0 %v1876, 112
        %v1879 = vpop.permute.xlu0 %1878
        %v1880 = vrot.slane %v1879, 4
        %v1881 = vsel %vm591, %v1879, %v1880
        %v1883 = vadd.f32 %v1837, %v1881
        %1884 = vrot.lane.b32.xlu0 %v1600, 34
        %v1885 = vpop.permute.xlu0 %1884
        %v1886 = vrot.slane %v1885, 4
        %v1887 = vsel %vm631, %v1886, %v1885
        %v1889 = vmul.f32 %v232, %v1887
        %s1890 = sld [smem:[#allocation6 + $0x8c]]
        %v1891 = vstv %s1890
        %v1892 = vmul.f32 %v1891, %v1889
        %v1894 = vrot.slane %v1892, 7
        %v1895 = vrot.slane %v1894, 4
        %1896 = vrot.lane.b32.xlu0 %v1895, 111
        %v1897 = vpop.permute.xlu0 %1896
        %v1898 = vrot.slane %v1897, 4
        %v1899 = vsel %vm642, %v1897, %v1898
        %v1901 = vadd.f32 %v1849, %v1899
        %s1902 = sld [smem:[#allocation6 + $0x8d]]
        %v1903 = vstv %s1902
        %v1904 = vmul.f32 %v1903, %v1889
        %v1906 = vrot.slane %v1904, 6
        %v1907 = vrot.slane %v1906, 4
        %1908 = vrot.lane.b32.xlu0 %v1907, 111
        %v1909 = vpop.permute.xlu0 %1908
        %v1910 = vrot.slane %v1909, 4
        %v1911 = vsel %vm642, %v1909, %v1910
        %v1913 = vadd.f32 %v1861, %v1911
        %s1914 = sld [smem:[#allocation6 + $0x8e]]
        %v1915 = vstv %s1914
        %v1916 = vmul.f32 %v1915, %v1889
        %v1918 = vrot.slane %v1916, 5
        %v1919 = vrot.slane %v1918, 4
        %1920 = vrot.lane.b32.xlu0 %v1919, 111
        %v1921 = vpop.permute.xlu0 %1920
        %v1922 = vrot.slane %v1921, 4
        %v1923 = vsel %vm642, %v1921, %v1922
        %v1925 = vadd.f32 %v1873, %v1923
        %s1926 = sld [smem:[#allocation6 + $0x8f]]
        %v1927 = vstv %s1926
        %v1928 = vmul.f32 %v1927, %v1889
        %1930 = vrot.lane.b32.xlu0 %v1928, 111
        %v1931 = vpop.permute.xlu0 %1930
        %v1932 = vrot.slane %v1931, 4
        %v1933 = vsel %vm642, %v1931, %v1932
        %v1935 = vadd.f32 %v1883, %v1933
        %v1937 = vlaneseq
        %v1938 = vshrl.u32 %v1937, 7
        %v1939 = vsub.s32 0, %v1938
        %v1940 = vrot.slane %v1901, %v1939
        %v1941 = vlaneseq
        %v1942 = vshrl.u32 %v1941, 7
        %v1943 = vsub.s32 4, %v1942
        %v1944 = vrot.slane %v1901, %v1943
        %v1948 = vlaneseq
        %v1949 = vshrl.u32 %v1948, 7
        %v1950 = vsub.s32 1, %v1949
        %v1951 = vrot.slane %v1913, %v1950
        %v1952 = vlaneseq
        %v1953 = vshrl.u32 %v1952, 7
        %v1954 = vsub.s32 5, %v1953
        %v1955 = vrot.slane %v1913, %v1954
        %v1959 = vlaneseq
        %v1960 = vshrl.u32 %v1959, 7
        %v1961 = vsub.s32 2, %v1960
        %v1962 = vrot.slane %v1925, %v1961
        %v1963 = vlaneseq
        %v1964 = vshrl.u32 %v1963, 7
        %v1965 = vsub.s32 6, %v1964
        %v1966 = vrot.slane %v1925, %v1965
        %v1970 = vlaneseq
        %v1971 = vshrl.u32 %v1970, 7
        %v1972 = vsub.s32 3, %v1971
        %v1973 = vrot.slane %v1935, %v1972
        %v1974 = vlaneseq
        %v1975 = vshrl.u32 %v1974, 7
        %v1976 = vsub.s32 7, %v1975
        %v1977 = vrot.slane %v1935, %v1976
        %vm1980 = vcmask 1040384
        %v1981 = vsel %vm1980, %v1940, %v1951
        %v1982 = vsel %vm1980, %v1944, %v1955
        %vm1983 = vcmask 1041408
        %v1984 = vsel %vm1983, %v1981, %v1962
        %v1985 = vsel %vm1983, %v1982, %v1966
        %vm1986 = vcmask 1042432
        %v1987 = vsel %vm1986, %v1984, %v1973
        %v1988 = vsel %vm1986, %v1985, %v1977
        %1991 = vrot.lane.b32.xlu0 %v1987, 111
        %v1992 = vpop.permute.xlu0 %1991
        %1993 = vrot.lane.b32.xlu0 %v1988, 111
        %v1994 = vpop.permute.xlu0 %1993
        %v1995 = vsel %vm642, %v1992, %v1994
        %1997 = vst [vmem:[%s231] sm:$0xf] %v1995
        %s1998 = sand.u32 %s114, 1
        %s1999 = scalar_lea.sflag [#allocation4], %s1998
        %s2000 = sand.u32 %s114, 1
        %s2001 = smul.addr %s2000, 4
        %s2002 = scalar_lea.vmem [#allocation9], %s2001
        // Predicated region
        $region45: #{tpu_custom_call.1} parent=31 // pred_check
          %p2003 = pneg %p124
        $region46: #{tpu_custom_call.1} parent=31 // pred_check_branch
          %2005 = sbr.rel (%p2003) target = $region48
        $region47: #{tpu_custom_call.1} parent=31 // pred_region
          %s2007 = ssub.s32 64, 64
          %2008 = vsyncadd %s1999, %s2007
          %s2009 = smul.addr %s26, 2
          %s2010 = sadd.s32 %s27, %s2009
          %s2011 = smul.addr %s2010, 64
          %s2012 = scalar_lea.hbm %s3, %s2011
          %s2014 = sshll.u32 %s2002, 4
          %s2015 = int_to_ptr.vmem [resolvable:$true] %s2014
          %2017 = dma.vmem_to_hbm [thread:$0]  %s2015, 64, %s2012, %s1999
        $region48: #{tpu_custom_call.1} parent=31 // pred_fallthru
          _
      $region32: #{tpu_custom_call.1} parent=5 // pred_fallthru
        _
      %p2018 = scmp.le.s32.totalorder 2, %s17
      // Predicated region
      $region49: #{tpu_custom_call.1} parent=5 // pred_check
        %p2019 = pneg %p2018
      $region50: #{tpu_custom_call.1} parent=5 // pred_check_branch
        %2021 = sbr.rel (%p2019) target = $region52
      $region51: #{tpu_custom_call.1} parent=5 // pred_region
        %s2022 = ssub.s32 %s17, 2
        // Predicated region
        $region53: #{tpu_custom_call.1} parent=51 // pred_check
          %p2023 = pneg %p130
        $region54: #{tpu_custom_call.1} parent=51 // pred_check_branch
          %2025 = sbr.rel (%p2023) target = $region56
        $region55: #{tpu_custom_call.1} parent=51 // pred_region
          %s2026 = sand.u32 %s115, 1
          %s2027 = scalar_lea.sflag [#allocation4], %s2026
          %s2028 = sand.u32 %s115, 1
          %s2029 = smul.addr %s2028, 4
          %s2030 = scalar_lea.vmem [#allocation9], %s2029
          %2031 = dma.done %s2027, 64
        $region56: #{tpu_custom_call.1} parent=51 // pred_fallthru
          _
      $region52: #{tpu_custom_call.1} parent=5 // pred_fallthru
        _
    $region6: #{tpu_custom_call.1} parent=1 // loop_footer
      %s21 = sadd.s32 1, %s17
    $region7: #{tpu_custom_call.1} parent=1 // loop_footer_branch
      %16 = sbr.rel target = $region3
    $region8: #{tpu_custom_call.1} parent=1 // loop_exit
      _
    %2032 = vsyncpa [#allocation3], 1
    %s2033 = scalar_lea.sflag [#allocation3], 1
    %2034 = vsyncpa %s2033, 1
    %2035 = vsyncpa [#allocation4], 1
    %s2036 = scalar_lea.sflag [#allocation4], 1
    %2037 = vsyncpa %s2036, 1
    %2038 = vsyncpa [#allocation5], 1
    %s2039 = scalar_lea.sflag [#allocation5], 1
    %2040 = vsyncpa %s2039, 1
    %2041 = vsyncpa [#allocation8], 1

</llo_original>
